<compile_context>
chip_gen: v7x
topology: tpu7x:2x2x1
jax: 0.10.0
libtpu: 0.0.40
codegen_flags: <defaults>
</compile_context>

<pallas_src>
import math
import functools

import jax
import jax.numpy as jnp
import numpy as np
from jax.experimental import pallas as pl
from jax.experimental.pallas import tpu as pltpu

LN_EPS = 1e-6


# ---------------------------------------------------------------------------
# In-kernel helpers
# ---------------------------------------------------------------------------
def _layernorm(x, gamma, beta, eps):
    # x: (M, H), gamma/beta: (1, H) -> broadcast over rows
    mean = jnp.mean(x, axis=-1, keepdims=True)
    var = jnp.mean(jnp.square(x - mean), axis=-1, keepdims=True)
    return (x - mean) * jax.lax.rsqrt(var + eps) * gamma + beta


def _encoder_kernel(
    x_ref, ln1g_ref, ln1b_ref, wqkv_ref, wo_ref,
    ln2g_ref, ln2b_ref, w1_ref, b1_ref, w2_ref, b2_ref,
    lastg_ref, lastb_ref, out_ref, *, num_heads, att_size,
):
    """One grid step = one (batch block, layer) pair."""
    l = pl.program_id(1)
    n_layers = pl.num_programs(1)
    b_blk, seq, hidden = out_ref.shape
    P = num_heads * att_size
    M = b_blk * seq

    # Layer 0: bring the input activations into the resident output block.
    @pl.when(l == 0)
    def _():
        out_ref[...] = x_ref[...]

    # (M, H) f32 layer carry; flatten batch block + seq for all weight matmuls.
    x = out_ref[...].reshape(M, hidden)

    # ---- self-attention branch -------------------------------------------
    y = _layernorm(x, ln1g_ref[0], ln1b_ref[0], LN_EPS)
    y16 = y.astype(jnp.bfloat16)
    # Fused Q|K|V projection; 1/sqrt(att) already folded into the Q columns.
    qkv = jnp.dot(y16, wqkv_ref[0], preferred_element_type=jnp.float32)   # (M, 3P)
    q = qkv[:, :P]
    k = qkv[:, P:2 * P]
    v = qkv[:, 2 * P:]

    # Per-head scores / PV as batch-blocked dot_generals; the head contexts are
    # concatenated and fed through a single (M, P) @ (P, H) output projection.
    # TODO(synk): for production num_heads / seq, switch to a (B*nh)-batched
    # dot_general (or fori_loop) to bound per-head live ranges, and add an
    # S-tile grid axis with flash-style online softmax + FFN filter tiling so
    # the per-step working set fits v7x's 64 MiB VMEM.
    ctx_heads = []
    for h in range(num_heads):
        lo = h * att_size
        qh = q[:, lo:lo + att_size].reshape(b_blk, seq, att_size).astype(jnp.bfloat16)
        kh = k[:, lo:lo + att_size].reshape(b_blk, seq, att_size).astype(jnp.bfloat16)
        vh = v[:, lo:lo + att_size].reshape(b_blk, seq, att_size).astype(jnp.bfloat16)
        s = jnp.einsum('bqd,bkd->bqk', qh, kh,
                       preferred_element_type=jnp.float32)                # (b, S, S)
        s = s - jnp.max(s, axis=-1, keepdims=True)
        e = jnp.exp(s)                                                    # f32
        denom = jnp.sum(e, axis=-1, keepdims=True)                        # (b, S, 1)
        ctx_h = jnp.einsum('bqk,bkd->bqd', e.astype(jnp.bfloat16), vh,
                           preferred_element_type=jnp.float32)            # (b, S, att)
        # Normalize AFTER the PV matmul: scale (S, att) rows, not (S, S) probs.
        ctx_heads.append(ctx_h * pl.reciprocal(denom, approx=True))
    ctx = jnp.concatenate(ctx_heads, axis=-1).reshape(M, P)               # (M, P)
    attn = jnp.dot(ctx.astype(jnp.bfloat16), wo_ref[0],
                   preferred_element_type=jnp.float32)                    # (M, H)
    x1 = x + attn                                           # residual 1

    # ---- feed-forward branch ---------------------------------------------
    y2 = _layernorm(x1, ln2g_ref[0], ln2b_ref[0], LN_EPS)
    hmid = jnp.dot(y2.astype(jnp.bfloat16), w1_ref[0],
                   preferred_element_type=jnp.float32) + b1_ref[0]
    hmid = jnp.maximum(hmid, 0.0)
    ff = jnp.dot(hmid.astype(jnp.bfloat16), w2_ref[0],
                 preferred_element_type=jnp.float32) + b2_ref[0]
    x2 = x1 + ff                                            # residual 2

    # Last layer: apply the encoder's final LayerNorm before writing back.
    @pl.when(l == n_layers - 1)
    def _():
        y_out = _layernorm(x2, lastg_ref[...], lastb_ref[...], LN_EPS)
        out_ref[...] = y_out.reshape(b_blk, seq, hidden)

    @pl.when(l < n_layers - 1)
    def _():
        out_ref[...] = x2.reshape(b_blk, seq, hidden)


# ---------------------------------------------------------------------------
# Pallas wrapper
# ---------------------------------------------------------------------------
def _pick_batch_block(batch, target=8):
    """Largest divisor of `batch` <= target, keeping >=2 parallel grid steps
    when possible so both v7x TensorCores stay fed."""
    divisors = [d for d in range(1, batch + 1) if batch % d == 0 and d <= target]
    best = max(divisors)
    if batch >= 2 and batch // best < 2:
        keep_two = [d for d in divisors if batch // d >= 2]
        if keep_two:
            best = max(keep_two)
    return best


def _pick_vmem_limit():
    """Generation-aware VMEM limit: ~80% of physical, clamped to [32, 100] MiB
    (v7x ~51 MiB of 64, v6e ~100 MiB of 128, v5e well above its 16 MiB default)."""
    try:
        cap = int(pltpu.get_tpu_info().vmem_capacity_bytes)
    except Exception:
        cap = 64 * 1024 * 1024
    return max(32 * 1024 * 1024, min(int(cap * 0.8), 100 * 1024 * 1024))


def encoder_forward(x, packed, last_g, last_b, *, num_heads, att_size,
                    batch_block=None):
    B, S, H = x.shape
    L = packed["wqkv"].shape[0]
    b_blk = batch_block if batch_block is not None else _pick_batch_block(B)
    assert B % b_blk == 0

    weights = (
        packed["ln1_g"], packed["ln1_b"], packed["wqkv"], packed["wo"],
        packed["ln2_g"], packed["ln2_b"], packed["w1"], packed["b1"],
        packed["w2"], packed["b2"], last_g, last_b,
    )

    def layer_spec(arr):
        tail = (0,) * (arr.ndim - 1)
        return pl.BlockSpec((1,) + arr.shape[1:],
                            lambda b, l, _t=tail: (l,) + _t)

    def rep_spec(arr):
        zeros = (0,) * arr.ndim
        return pl.BlockSpec(arr.shape, lambda b, l, _z=zeros: _z)

    in_specs = [pl.BlockSpec((b_blk, S, H), lambda b, l: (b, 0, 0))]
    in_specs += [layer_spec(w) for w in weights[:10]]   # per-layer stacked
    in_specs += [rep_spec(w) for w in weights[10:]]     # last-norm params

    kernel = functools.partial(
        _encoder_kernel, num_heads=num_heads, att_size=att_size)

    # TODO(synk): if divide=False (P = head_size * hidden) at production sizes,
    # the (M, 3P) qkv intermediate must additionally be tiled over heads/seq.
    return pl.pallas_call(
        kernel,
        out_shape=jax.ShapeDtypeStruct((B, S, H), jnp.float32),
        grid=(B // b_blk, L),
        in_specs=in_specs,
        out_specs=pl.BlockSpec((b_blk, S, H), lambda b, l: (b, 0, 0)),
        compiler_params=pltpu.CompilerParams(
            dimension_semantics=("parallel", "arbitrary"),
            vmem_limit_bytes=_pick_vmem_limit(),
        ),
    )(x, *weights)


# ---------------------------------------------------------------------------
# Parameter construction (deterministic, mirrors the PyTorch __init__)
# ---------------------------------------------------------------------------
def _xavier(key, in_dim, out_dim):
    # torch weight is (out, in); we store the (in, out) transpose so x @ W works.
    bound = math.sqrt(6.0 / (in_dim + out_dim))
    return jax.random.uniform(key, (in_dim, out_dim), jnp.float32, -bound, bound)


def init_params(key, hidden, filter_size, n_layers, head_size, divide):
    att = hidden // head_size if divide else hidden
    P = head_size * att
    layers = []
    for _ in range(n_layers):
        key, *ks = jax.random.split(key, 7)
        layers.append(dict(
            ln1_g=jnp.ones((1, hidden), jnp.float32),
            ln1_b=jnp.zeros((1, hidden), jnp.float32),
            wq=_xavier(ks[0], hidden, P),
            wk=_xavier(ks[1], hidden, P),
            wv=_xavier(ks[2], hidden, P),
            wo=_xavier(ks[3], P, hidden),
            ln2_g=jnp.ones((1, hidden), jnp.float32),
            ln2_b=jnp.zeros((1, hidden), jnp.float32),
            w1=_xavier(ks[4], hidden, filter_size),
            b1=jnp.zeros((1, filter_size), jnp.float32),   # initialize_weight -> bias 0
            w2=_xavier(ks[5], filter_size, hidden),
            b2=jnp.zeros((1, hidden), jnp.float32),
        ))
    last_g = jnp.ones((1, hidden), jnp.float32)
    last_b = jnp.zeros((1, hidden), jnp.float32)
    return layers, last_g, last_b, att


def pack_for_kernel(layer_params, *, att_size):
    """Stack per-layer params on a leading L axis, fuse Q|K|V (with the
    1/sqrt(att) scale folded into Q), and cast matmul weights to bf16."""
    scale = att_size ** (-0.5)
    stack = lambda name: jnp.stack([p[name] for p in layer_params])
    wqkv = jnp.stack([
        jnp.concatenate([p["wq"] * scale, p["wk"], p["wv"]], axis=1)
        for p in layer_params
    ]).astype(jnp.bfloat16)
    return dict(
        ln1_g=stack("ln1_g"), ln1_b=stack("ln1_b"),
        wqkv=wqkv,
        wo=stack("wo").astype(jnp.bfloat16),
        ln2_g=stack("ln2_g"), ln2_b=stack("ln2_b"),
        w1=stack("w1").astype(jnp.bfloat16), b1=stack("b1"),
        w2=stack("w2").astype(jnp.bfloat16), b2=stack("b2"),
    )


# ---------------------------------------------------------------------------
# Pure-JAX f32 reference (for the correctness check)
# ---------------------------------------------------------------------------
def reference_forward(x, layer_params, last_g, last_b, num_heads, att):
    def ln(z, g, b):
        m = z.mean(-1, keepdims=True)
        v = ((z - m) ** 2).mean(-1, keepdims=True)
        return (z - m) / jnp.sqrt(v + LN_EPS) * g + b

    B, S, H = x.shape
    for p in layer_params:
        y = ln(x, p["ln1_g"], p["ln1_b"])
        q = (y @ p["wq"]) * att ** (-0.5)
        k = y @ p["wk"]
        v = y @ p["wv"]
        q = q.reshape(B, S, num_heads, att).transpose(0, 2, 1, 3)
        k = k.reshape(B, S, num_heads, att).transpose(0, 2, 1, 3)
        v = v.reshape(B, S, num_heads, att).transpose(0, 2, 1, 3)
        s = jax.nn.softmax(q @ jnp.swapaxes(k, -1, -2), axis=-1)
        ctx = (s @ v).transpose(0, 2, 1, 3).reshape(B, S, -1)
        x = x + ctx @ p["wo"]
        y2 = ln(x, p["ln2_g"], p["ln2_b"])
        x = x + (jnp.maximum(y2 @ p["w1"] + p["b1"], 0.0) @ p["w2"] + p["b2"])
    return ln(x, last_g, last_b)


# ---------------------------------------------------------------------------
if __name__ == "__main__":
    B, S = 4, 8
    hidden, filter_size = 32, 64
    n_layers, head_size = 2, 4
    divide = True

    key = jax.random.PRNGKey(0)
    key, kx, kp = jax.random.split(key, 3)
    layer_params, last_g, last_b, att = init_params(
        kp, hidden, filter_size, n_layers, head_size, divide)
    x = jax.random.normal(kx, (B, S, hidden), jnp.float32)

    packed = pack_for_kernel(layer_params, att_size=att)
    out = encoder_forward(x, packed, last_g, last_b,
                          num_heads=head_size, att_size=att)
    out = jax.block_until_ready(out)

    ref = reference_forward(x, layer_params, last_g, last_b, head_size, att)
    ref = jax.block_until_ready(ref)

    # Kernel matmuls use bf16 operands (f32 accumulation) + approx reciprocal,
    # while the reference is pure f32 -> tolerance covers bf16 rounding.
    np.testing.assert_allclose(np.asarray(out), np.asarray(ref),
                               rtol=3e-2, atol=3e-2)
    print("KERNEL_OK")
</pallas_src>

<mosaic_0001>
module attributes {stable_mosaic.version = 11 : i64} {
  func.func @_encoder_kernel(%arg0: i32, %arg1: i32, %arg2: memref<2x8x32xf32, #tpu.memory_space<vmem>>, %arg3: memref<1x1x32xf32, #tpu.memory_space<vmem>>, %arg4: memref<1x1x32xf32, #tpu.memory_space<vmem>>, %arg5: memref<1x32x96xbf16, #tpu.memory_space<vmem>>, %arg6: memref<1x32x32xbf16, #tpu.memory_space<vmem>>, %arg7: memref<1x1x32xf32, #tpu.memory_space<vmem>>, %arg8: memref<1x1x32xf32, #tpu.memory_space<vmem>>, %arg9: memref<1x32x64xbf16, #tpu.memory_space<vmem>>, %arg10: memref<1x1x64xf32, #tpu.memory_space<vmem>>, %arg11: memref<1x64x32xbf16, #tpu.memory_space<vmem>>, %arg12: memref<1x1x32xf32, #tpu.memory_space<vmem>>, %arg13: memref<1x32xf32, #tpu.memory_space<vmem>>, %arg14: memref<1x32xf32, #tpu.memory_space<vmem>>, %arg15: memref<2x8x32xf32, #tpu.memory_space<vmem>>) attributes {dimension_semantics = [#tpu.dimension_semantics<parallel>, #tpu.dimension_semantics<arbitrary>], iteration_bounds = array<i64: 2, 2>, scalar_prefetch = 0 : i64, scratch_operands = 0 : i64, tpu.core_type = #tpu.core_type<tc>, window_params = [{transform_indices = @transform_0, window_bounds = array<i64: 2, 8, 32>}, {transform_indices = @transform_1, window_bounds = array<i64: 1, 1, 32>}, {transform_indices = @transform_2, window_bounds = array<i64: 1, 1, 32>}, {transform_indices = @transform_3, window_bounds = array<i64: 1, 32, 96>}, {transform_indices = @transform_4, window_bounds = array<i64: 1, 32, 32>}, {transform_indices = @transform_5, window_bounds = array<i64: 1, 1, 32>}, {transform_indices = @transform_6, window_bounds = array<i64: 1, 1, 32>}, {transform_indices = @transform_7, window_bounds = array<i64: 1, 32, 64>}, {transform_indices = @transform_8, window_bounds = array<i64: 1, 1, 64>}, {transform_indices = @transform_9, window_bounds = array<i64: 1, 64, 32>}, {transform_indices = @transform_10, window_bounds = array<i64: 1, 1, 32>}, {pipeline_mode = #tpu.pipeline_mode<synchronous>, transform_indices = @transform_11, window_bounds = array<i64: 1, 32>}, {pipeline_mode = #tpu.pipeline_mode<synchronous>, transform_indices = @transform_12, window_bounds = array<i64: 1, 32>}, {transform_indices = @transform_13, window_bounds = array<i64: 2, 8, 32>}]} {
    %c0_i32 = arith.constant 0 : i32
    %0 = arith.cmpi eq, %arg1, %c0_i32 : i32
    %1 = arith.extui %0 : i1 to i32
    %c0_i32_0 = arith.constant 0 : i32
    %2 = arith.cmpi ne, %1, %c0_i32_0 : i32
    scf.if %2 {
      %c0_66 = arith.constant 0 : index
      %c0_67 = arith.constant 0 : index
      %c0_68 = arith.constant 0 : index
      %184 = vector.load %arg2[%c0_66, %c0_67, %c0_68] : memref<2x8x32xf32, #tpu.memory_space<vmem>>, vector<2x8x32xf32>
      %c0_69 = arith.constant 0 : index
      %c0_70 = arith.constant 0 : index
      %c0_71 = arith.constant 0 : index
      %185 = vector.load %arg15[%c0_69, %c0_70, %c0_71] : memref<2x8x32xf32, #tpu.memory_space<vmem>>, vector<2x8x32xf32>
      tpu.vector_store %arg15[%c0_69, %c0_70, %c0_71], %184 {strides = array<i32>} : memref<2x8x32xf32, #tpu.memory_space<vmem>>, vector<2x8x32xf32>,
    } else {
    }
    %c0 = arith.constant 0 : index
    %c0_1 = arith.constant 0 : index
    %c0_2 = arith.constant 0 : index
    %3 = vector.load %arg15[%c0, %c0_1, %c0_2] : memref<2x8x32xf32, #tpu.memory_space<vmem>>, vector<2x8x32xf32>
    %4 = vector.shape_cast %3 : vector<2x8x32xf32> to vector<16x32xf32>
    %c0_3 = arith.constant 0 : index
    %c0_4 = arith.constant 0 : index
    %c0_5 = arith.constant 0 : index
    %5 = vector.load %arg3[%c0_3, %c0_4, %c0_5] : memref<1x1x32xf32, #tpu.memory_space<vmem>>, vector<1x1x32xf32>
    %6 = vector.shape_cast %5 : vector<1x1x32xf32> to vector<1x32xf32>
    %c0_6 = arith.constant 0 : index
    %c0_7 = arith.constant 0 : index
    %c0_8 = arith.constant 0 : index
    %7 = vector.load %arg4[%c0_6, %c0_7, %c0_8] : memref<1x1x32xf32, #tpu.memory_space<vmem>>, vector<1x1x32xf32>
    %8 = vector.shape_cast %7 : vector<1x1x32xf32> to vector<1x32xf32>
    %cst = arith.constant dense<0.000000e+00> : vector<16xf32>
    %9 = vector.multi_reduction <add>, %4, %cst [1] : vector<16x32xf32> to vector<16xf32>
    %10 = vector.shape_cast %9 : vector<16xf32> to vector<16x1xf32>
    %cst_9 = arith.constant 3.200000e+01 : f32
    %11 = vector.broadcast %cst_9 : f32 to vector<16x1xf32>
    %12 = arith.divf %10, %11 : vector<16x1xf32>
    %13 = vector.broadcast %12 : vector<16x1xf32> to vector<16x32xf32>
    %14 = arith.subf %4, %13 : vector<16x32xf32>
    %15 = arith.mulf %14, %14 : vector<16x32xf32>
    %cst_10 = arith.constant dense<0.000000e+00> : vector<16xf32>
    %16 = vector.multi_reduction <add>, %15, %cst_10 [1] : vector<16x32xf32> to vector<16xf32>
    %17 = vector.shape_cast %16 : vector<16xf32> to vector<16x1xf32>
    %cst_11 = arith.constant 3.200000e+01 : f32
    %18 = vector.broadcast %cst_11 : f32 to vector<16x1xf32>
    %19 = arith.divf %17, %18 : vector<16x1xf32>
    %20 = vector.broadcast %12 : vector<16x1xf32> to vector<16x32xf32>
    %21 = arith.subf %4, %20 : vector<16x32xf32>
    %cst_12 = arith.constant 9.99999997E-7 : f32
    %22 = vector.broadcast %cst_12 : f32 to vector<16x1xf32>
    %23 = arith.addf %19, %22 : vector<16x1xf32>
    %24 = math.rsqrt %23 : vector<16x1xf32>
    %25 = vector.broadcast %24 : vector<16x1xf32> to vector<16x32xf32>
    %26 = arith.mulf %21, %25 : vector<16x32xf32>
    %27 = vector.broadcast %6 : vector<1x32xf32> to vector<16x32xf32>
    %28 = arith.mulf %26, %27 : vector<16x32xf32>
    %29 = vector.broadcast %8 : vector<1x32xf32> to vector<16x32xf32>
    %30 = arith.addf %28, %29 : vector<16x32xf32>
    %31 = arith.truncf %30 : vector<16x32xf32> to vector<16x32xbf16>
    %c0_13 = arith.constant 0 : index
    %c0_14 = arith.constant 0 : index
    %c0_15 = arith.constant 0 : index
    %32 = vector.load %arg5[%c0_13, %c0_14, %c0_15] : memref<1x32x96xbf16, #tpu.memory_space<vmem>>, vector<1x32x96xbf16>
    %33 = vector.shape_cast %32 : vector<1x32x96xbf16> to vector<32x96xbf16>
    %cst_16 = arith.constant dense<0.000000e+00> : vector<16x96xf32>
    %34 = tpu.matmul %31, %33, %cst_16 {dimension_numbers = #tpu.dot_dimension_numbers<[1], [0], [0], [1], [0, 0, 1, 1], [], []>} : vector<16x32xbf16>, vector<32x96xbf16>, vector<16x96xf32> -> vector<16x96xf32>
    %35 = vector.extract_strided_slice %34 {offsets = [0, 0], sizes = [16, 32], strides = [1, 1]} : vector<16x96xf32> to vector<16x32xf32>
    %36 = vector.extract_strided_slice %34 {offsets = [0, 32], sizes = [16, 32], strides = [1, 1]} : vector<16x96xf32> to vector<16x32xf32>
    %37 = vector.extract_strided_slice %34 {offsets = [0, 64], sizes = [16, 32], strides = [1, 1]} : vector<16x96xf32> to vector<16x32xf32>
    %38 = vector.extract_strided_slice %35 {offsets = [0, 0], sizes = [16, 8], strides = [1, 1]} : vector<16x32xf32> to vector<16x8xf32>
    %39 = vector.shape_cast %38 : vector<16x8xf32> to vector<2x8x8xf32>
    %40 = arith.truncf %39 : vector<2x8x8xf32> to vector<2x8x8xbf16>
    %41 = vector.extract_strided_slice %36 {offsets = [0, 0], sizes = [16, 8], strides = [1, 1]} : vector<16x32xf32> to vector<16x8xf32>
    %42 = vector.shape_cast %41 : vector<16x8xf32> to vector<2x8x8xf32>
    %43 = arith.truncf %42 : vector<2x8x8xf32> to vector<2x8x8xbf16>
    %44 = vector.extract_strided_slice %37 {offsets = [0, 0], sizes = [16, 8], strides = [1, 1]} : vector<16x32xf32> to vector<16x8xf32>
    %45 = vector.shape_cast %44 : vector<16x8xf32> to vector<2x8x8xf32>
    %46 = arith.truncf %45 : vector<2x8x8xf32> to vector<2x8x8xbf16>
    "tpu.trace_start"() <{level = 10 : i32, message = "bqd,bkd->bqk"}> : () -> ()
    %cst_17 = arith.constant dense<0.000000e+00> : vector<2x8x8xf32>
    %47 = tpu.matmul %40, %43, %cst_17 {dimension_numbers = #tpu.dot_dimension_numbers<[2], [2], [1], [1], [0, 0, 0, 1, 1, 1], [0], [0]>} : vector<2x8x8xbf16>, vector<2x8x8xbf16>, vector<2x8x8xf32> -> vector<2x8x8xf32>
    "tpu.trace_stop"() : () -> ()
    %cst_18 = arith.constant dense<0xFF800000> : vector<2x8xf32>
    %48 = vector.multi_reduction <maximumf>, %47, %cst_18 [2] : vector<2x8x8xf32> to vector<2x8xf32>
    %49 = vector.shape_cast %48 : vector<2x8xf32> to vector<2x8x1xf32>
    %50 = vector.broadcast %49 : vector<2x8x1xf32> to vector<2x8x8xf32>
    %51 = arith.subf %47, %50 : vector<2x8x8xf32>
    %52 = math.exp %51 : vector<2x8x8xf32>
    %cst_19 = arith.constant dense<0.000000e+00> : vector<2x8xf32>
    %53 = vector.multi_reduction <add>, %52, %cst_19 [2] : vector<2x8x8xf32> to vector<2x8xf32>
    %54 = vector.shape_cast %53 : vector<2x8xf32> to vector<2x8x1xf32>
    %55 = arith.truncf %52 : vector<2x8x8xf32> to vector<2x8x8xbf16>
    "tpu.trace_start"() <{level = 10 : i32, message = "bqk,bkd->bqd"}> : () -> ()
    %cst_20 = arith.constant dense<0.000000e+00> : vector<2x8x8xf32>
    %56 = tpu.matmul %55, %46, %cst_20 {dimension_numbers = #tpu.dot_dimension_numbers<[2], [1], [1], [2], [0, 0, 0, 1, 1, 2], [0], [0]>} : vector<2x8x8xbf16>, vector<2x8x8xbf16>, vector<2x8x8xf32> -> vector<2x8x8xf32>
    "tpu.trace_stop"() : () -> ()
    %57 = tpu.reciprocal %54 {approx = true} : vector<2x8x1xf32> -> vector<2x8x1xf32>
    %58 = vector.broadcast %57 : vector<2x8x1xf32> to vector<2x8x8xf32>
    %59 = arith.mulf %56, %58 : vector<2x8x8xf32>
    %60 = vector.extract_strided_slice %35 {offsets = [0, 8], sizes = [16, 8], strides = [1, 1]} : vector<16x32xf32> to vector<16x8xf32>
    %61 = vector.shape_cast %60 : vector<16x8xf32> to vector<2x8x8xf32>
    %62 = arith.truncf %61 : vector<2x8x8xf32> to vector<2x8x8xbf16>
    %63 = vector.extract_strided_slice %36 {offsets = [0, 8], sizes = [16, 8], strides = [1, 1]} : vector<16x32xf32> to vector<16x8xf32>
    %64 = vector.shape_cast %63 : vector<16x8xf32> to vector<2x8x8xf32>
    %65 = arith.truncf %64 : vector<2x8x8xf32> to vector<2x8x8xbf16>
    %66 = vector.extract_strided_slice %37 {offsets = [0, 8], sizes = [16, 8], strides = [1, 1]} : vector<16x32xf32> to vector<16x8xf32>
    %67 = vector.shape_cast %66 : vector<16x8xf32> to vector<2x8x8xf32>
    %68 = arith.truncf %67 : vector<2x8x8xf32> to vector<2x8x8xbf16>
    "tpu.trace_start"() <{level = 10 : i32, message = "bqd,bkd->bqk"}> : () -> ()
    %cst_21 = arith.constant dense<0.000000e+00> : vector<2x8x8xf32>
    %69 = tpu.matmul %62, %65, %cst_21 {dimension_numbers = #tpu.dot_dimension_numbers<[2], [2], [1], [1], [0, 0, 0, 1, 1, 1], [0], [0]>} : vector<2x8x8xbf16>, vector<2x8x8xbf16>, vector<2x8x8xf32> -> vector<2x8x8xf32>
    "tpu.trace_stop"() : () -> ()
    %cst_22 = arith.constant dense<0xFF800000> : vector<2x8xf32>
    %70 = vector.multi_reduction <maximumf>, %69, %cst_22 [2] : vector<2x8x8xf32> to vector<2x8xf32>
    %71 = vector.shape_cast %70 : vector<2x8xf32> to vector<2x8x1xf32>
    %72 = vector.broadcast %71 : vector<2x8x1xf32> to vector<2x8x8xf32>
    %73 = arith.subf %69, %72 : vector<2x8x8xf32>
    %74 = math.exp %73 : vector<2x8x8xf32>
    %cst_23 = arith.constant dense<0.000000e+00> : vector<2x8xf32>
    %75 = vector.multi_reduction <add>, %74, %cst_23 [2] : vector<2x8x8xf32> to vector<2x8xf32>
    %76 = vector.shape_cast %75 : vector<2x8xf32> to vector<2x8x1xf32>
    %77 = arith.truncf %74 : vector<2x8x8xf32> to vector<2x8x8xbf16>
    "tpu.trace_start"() <{level = 10 : i32, message = "bqk,bkd->bqd"}> : () -> ()
    %cst_24 = arith.constant dense<0.000000e+00> : vector<2x8x8xf32>
    %78 = tpu.matmul %77, %68, %cst_24 {dimension_numbers = #tpu.dot_dimension_numbers<[2], [1], [1], [2], [0, 0, 0, 1, 1, 2], [0], [0]>} : vector<2x8x8xbf16>, vector<2x8x8xbf16>, vector<2x8x8xf32> -> vector<2x8x8xf32>
    "tpu.trace_stop"() : () -> ()
    %79 = tpu.reciprocal %76 {approx = true} : vector<2x8x1xf32> -> vector<2x8x1xf32>
    %80 = vector.broadcast %79 : vector<2x8x1xf32> to vector<2x8x8xf32>
    %81 = arith.mulf %78, %80 : vector<2x8x8xf32>
    %82 = vector.extract_strided_slice %35 {offsets = [0, 16], sizes = [16, 8], strides = [1, 1]} : vector<16x32xf32> to vector<16x8xf32>
    %83 = vector.shape_cast %82 : vector<16x8xf32> to vector<2x8x8xf32>
    %84 = arith.truncf %83 : vector<2x8x8xf32> to vector<2x8x8xbf16>
    %85 = vector.extract_strided_slice %36 {offsets = [0, 16], sizes = [16, 8], strides = [1, 1]} : vector<16x32xf32> to vector<16x8xf32>
    %86 = vector.shape_cast %85 : vector<16x8xf32> to vector<2x8x8xf32>
    %87 = arith.truncf %86 : vector<2x8x8xf32> to vector<2x8x8xbf16>
    %88 = vector.extract_strided_slice %37 {offsets = [0, 16], sizes = [16, 8], strides = [1, 1]} : vector<16x32xf32> to vector<16x8xf32>
    %89 = vector.shape_cast %88 : vector<16x8xf32> to vector<2x8x8xf32>
    %90 = arith.truncf %89 : vector<2x8x8xf32> to vector<2x8x8xbf16>
    "tpu.trace_start"() <{level = 10 : i32, message = "bqd,bkd->bqk"}> : () -> ()
    %cst_25 = arith.constant dense<0.000000e+00> : vector<2x8x8xf32>
    %91 = tpu.matmul %84, %87, %cst_25 {dimension_numbers = #tpu.dot_dimension_numbers<[2], [2], [1], [1], [0, 0, 0, 1, 1, 1], [0], [0]>} : vector<2x8x8xbf16>, vector<2x8x8xbf16>, vector<2x8x8xf32> -> vector<2x8x8xf32>
    "tpu.trace_stop"() : () -> ()
    %cst_26 = arith.constant dense<0xFF800000> : vector<2x8xf32>
    %92 = vector.multi_reduction <maximumf>, %91, %cst_26 [2] : vector<2x8x8xf32> to vector<2x8xf32>
    %93 = vector.shape_cast %92 : vector<2x8xf32> to vector<2x8x1xf32>
    %94 = vector.broadcast %93 : vector<2x8x1xf32> to vector<2x8x8xf32>
    %95 = arith.subf %91, %94 : vector<2x8x8xf32>
    %96 = math.exp %95 : vector<2x8x8xf32>
    %cst_27 = arith.constant dense<0.000000e+00> : vector<2x8xf32>
    %97 = vector.multi_reduction <add>, %96, %cst_27 [2] : vector<2x8x8xf32> to vector<2x8xf32>
    %98 = vector.shape_cast %97 : vector<2x8xf32> to vector<2x8x1xf32>
    %99 = arith.truncf %96 : vector<2x8x8xf32> to vector<2x8x8xbf16>
    "tpu.trace_start"() <{level = 10 : i32, message = "bqk,bkd->bqd"}> : () -> ()
    %cst_28 = arith.constant dense<0.000000e+00> : vector<2x8x8xf32>
    %100 = tpu.matmul %99, %90, %cst_28 {dimension_numbers = #tpu.dot_dimension_numbers<[2], [1], [1], [2], [0, 0, 0, 1, 1, 2], [0], [0]>} : vector<2x8x8xbf16>, vector<2x8x8xbf16>, vector<2x8x8xf32> -> vector<2x8x8xf32>
    "tpu.trace_stop"() : () -> ()
    %101 = tpu.reciprocal %98 {approx = true} : vector<2x8x1xf32> -> vector<2x8x1xf32>
    %102 = vector.broadcast %101 : vector<2x8x1xf32> to vector<2x8x8xf32>
    %103 = arith.mulf %100, %102 : vector<2x8x8xf32>
    %104 = vector.extract_strided_slice %35 {offsets = [0, 24], sizes = [16, 8], strides = [1, 1]} : vector<16x32xf32> to vector<16x8xf32>
    %105 = vector.shape_cast %104 : vector<16x8xf32> to vector<2x8x8xf32>
    %106 = arith.truncf %105 : vector<2x8x8xf32> to vector<2x8x8xbf16>
    %107 = vector.extract_strided_slice %36 {offsets = [0, 24], sizes = [16, 8], strides = [1, 1]} : vector<16x32xf32> to vector<16x8xf32>
    %108 = vector.shape_cast %107 : vector<16x8xf32> to vector<2x8x8xf32>
    %109 = arith.truncf %108 : vector<2x8x8xf32> to vector<2x8x8xbf16>
    %110 = vector.extract_strided_slice %37 {offsets = [0, 24], sizes = [16, 8], strides = [1, 1]} : vector<16x32xf32> to vector<16x8xf32>
    %111 = vector.shape_cast %110 : vector<16x8xf32> to vector<2x8x8xf32>
    %112 = arith.truncf %111 : vector<2x8x8xf32> to vector<2x8x8xbf16>
    "tpu.trace_start"() <{level = 10 : i32, message = "bqd,bkd->bqk"}> : () -> ()
    %cst_29 = arith.constant dense<0.000000e+00> : vector<2x8x8xf32>
    %113 = tpu.matmul %106, %109, %cst_29 {dimension_numbers = #tpu.dot_dimension_numbers<[2], [2], [1], [1], [0, 0, 0, 1, 1, 1], [0], [0]>} : vector<2x8x8xbf16>, vector<2x8x8xbf16>, vector<2x8x8xf32> -> vector<2x8x8xf32>
    "tpu.trace_stop"() : () -> ()
    %cst_30 = arith.constant dense<0xFF800000> : vector<2x8xf32>
    %114 = vector.multi_reduction <maximumf>, %113, %cst_30 [2] : vector<2x8x8xf32> to vector<2x8xf32>
    %115 = vector.shape_cast %114 : vector<2x8xf32> to vector<2x8x1xf32>
    %116 = vector.broadcast %115 : vector<2x8x1xf32> to vector<2x8x8xf32>
    %117 = arith.subf %113, %116 : vector<2x8x8xf32>
    %118 = math.exp %117 : vector<2x8x8xf32>
    %cst_31 = arith.constant dense<0.000000e+00> : vector<2x8xf32>
    %119 = vector.multi_reduction <add>, %118, %cst_31 [2] : vector<2x8x8xf32> to vector<2x8xf32>
    %120 = vector.shape_cast %119 : vector<2x8xf32> to vector<2x8x1xf32>
    %121 = arith.truncf %118 : vector<2x8x8xf32> to vector<2x8x8xbf16>
    "tpu.trace_start"() <{level = 10 : i32, message = "bqk,bkd->bqd"}> : () -> ()
    %cst_32 = arith.constant dense<0.000000e+00> : vector<2x8x8xf32>
    %122 = tpu.matmul %121, %112, %cst_32 {dimension_numbers = #tpu.dot_dimension_numbers<[2], [1], [1], [2], [0, 0, 0, 1, 1, 2], [0], [0]>} : vector<2x8x8xbf16>, vector<2x8x8xbf16>, vector<2x8x8xf32> -> vector<2x8x8xf32>
    "tpu.trace_stop"() : () -> ()
    %123 = tpu.reciprocal %120 {approx = true} : vector<2x8x1xf32> -> vector<2x8x1xf32>
    %124 = vector.broadcast %123 : vector<2x8x1xf32> to vector<2x8x8xf32>
    %125 = arith.mulf %122, %124 : vector<2x8x8xf32>
    %126 = tpu.concatenate %59, %81, %103, %125 in 2 : vector<2x8x8xf32>, vector<2x8x8xf32>, vector<2x8x8xf32>, vector<2x8x8xf32> -> vector<2x8x32xf32>
    %127 = vector.shape_cast %126 : vector<2x8x32xf32> to vector<16x32xf32>
    %128 = arith.truncf %127 : vector<16x32xf32> to vector<16x32xbf16>
    %c0_33 = arith.constant 0 : index
    %c0_34 = arith.constant 0 : index
    %c0_35 = arith.constant 0 : index
    %129 = vector.load %arg6[%c0_33, %c0_34, %c0_35] : memref<1x32x32xbf16, #tpu.memory_space<vmem>>, vector<1x32x32xbf16>
    %130 = vector.shape_cast %129 : vector<1x32x32xbf16> to vector<32x32xbf16>
    %cst_36 = arith.constant dense<0.000000e+00> : vector<16x32xf32>
    %131 = tpu.matmul %128, %130, %cst_36 {dimension_numbers = #tpu.dot_dimension_numbers<[1], [0], [0], [1], [0, 0, 1, 1], [], []>} : vector<16x32xbf16>, vector<32x32xbf16>, vector<16x32xf32> -> vector<16x32xf32>
    %132 = arith.addf %4, %131 : vector<16x32xf32>
    %c0_37 = arith.constant 0 : index
    %c0_38 = arith.constant 0 : index
    %c0_39 = arith.constant 0 : index
    %133 = vector.load %arg7[%c0_37, %c0_38, %c0_39] : memref<1x1x32xf32, #tpu.memory_space<vmem>>, vector<1x1x32xf32>
    %134 = vector.shape_cast %133 : vector<1x1x32xf32> to vector<1x32xf32>
    %c0_40 = arith.constant 0 : index
    %c0_41 = arith.constant 0 : index
    %c0_42 = arith.constant 0 : index
    %135 = vector.load %arg8[%c0_40, %c0_41, %c0_42] : memref<1x1x32xf32, #tpu.memory_space<vmem>>, vector<1x1x32xf32>
    %136 = vector.shape_cast %135 : vector<1x1x32xf32> to vector<1x32xf32>
    %cst_43 = arith.constant dense<0.000000e+00> : vector<16xf32>
    %137 = vector.multi_reduction <add>, %132, %cst_43 [1] : vector<16x32xf32> to vector<16xf32>
    %138 = vector.shape_cast %137 : vector<16xf32> to vector<16x1xf32>
    %cst_44 = arith.constant 3.200000e+01 : f32
    %139 = vector.broadcast %cst_44 : f32 to vector<16x1xf32>
    %140 = arith.divf %138, %139 : vector<16x1xf32>
    %141 = vector.broadcast %140 : vector<16x1xf32> to vector<16x32xf32>
    %142 = arith.subf %132, %141 : vector<16x32xf32>
    %143 = arith.mulf %142, %142 : vector<16x32xf32>
    %cst_45 = arith.constant dense<0.000000e+00> : vector<16xf32>
    %144 = vector.multi_reduction <add>, %143, %cst_45 [1] : vector<16x32xf32> to vector<16xf32>
    %145 = vector.shape_cast %144 : vector<16xf32> to vector<16x1xf32>
    %cst_46 = arith.constant 3.200000e+01 : f32
    %146 = vector.broadcast %cst_46 : f32 to vector<16x1xf32>
    %147 = arith.divf %145, %146 : vector<16x1xf32>
    %148 = vector.broadcast %140 : vector<16x1xf32> to vector<16x32xf32>
    %149 = arith.subf %132, %148 : vector<16x32xf32>
    %cst_47 = arith.constant 9.99999997E-7 : f32
    %150 = vector.broadcast %cst_47 : f32 to vector<16x1xf32>
    %151 = arith.addf %147, %150 : vector<16x1xf32>
    %152 = math.rsqrt %151 : vector<16x1xf32>
    %153 = vector.broadcast %152 : vector<16x1xf32> to vector<16x32xf32>
    %154 = arith.mulf %149, %153 : vector<16x32xf32>
    %155 = vector.broadcast %134 : vector<1x32xf32> to vector<16x32xf32>
    %156 = arith.mulf %154, %155 : vector<16x32xf32>
    %157 = vector.broadcast %136 : vector<1x32xf32> to vector<16x32xf32>
    %158 = arith.addf %156, %157 : vector<16x32xf32>
    %159 = arith.truncf %158 : vector<16x32xf32> to vector<16x32xbf16>
    %c0_48 = arith.constant 0 : index
    %c0_49 = arith.constant 0 : index
    %c0_50 = arith.constant 0 : index
    %160 = vector.load %arg9[%c0_48, %c0_49, %c0_50] : memref<1x32x64xbf16, #tpu.memory_space<vmem>>, vector<1x32x64xbf16>
    %161 = vector.shape_cast %160 : vector<1x32x64xbf16> to vector<32x64xbf16>
    %cst_51 = arith.constant dense<0.000000e+00> : vector<16x64xf32>
    %162 = tpu.matmul %159, %161, %cst_51 {dimension_numbers = #tpu.dot_dimension_numbers<[1], [0], [0], [1], [0, 0, 1, 1], [], []>} : vector<16x32xbf16>, vector<32x64xbf16>, vector<16x64xf32> -> vector<16x64xf32>
    %c0_52 = arith.constant 0 : index
    %c0_53 = arith.constant 0 : index
    %c0_54 = arith.constant 0 : index
    %163 = vector.load %arg10[%c0_52, %c0_53, %c0_54] : memref<1x1x64xf32, #tpu.memory_space<vmem>>, vector<1x1x64xf32>
    %164 = vector.shape_cast %163 : vector<1x1x64xf32> to vector<1x64xf32>
    %165 = vector.broadcast %164 : vector<1x64xf32> to vector<16x64xf32>
    %166 = arith.addf %162, %165 : vector<16x64xf32>
    %cst_55 = arith.constant 0.000000e+00 : f32
    %167 = vector.broadcast %cst_55 : f32 to vector<16x64xf32>
    %168 = arith.maximumf %166, %167 : vector<16x64xf32>
    %169 = arith.truncf %168 : vector<16x64xf32> to vector<16x64xbf16>
    %c0_56 = arith.constant 0 : index
    %c0_57 = arith.constant 0 : index
    %c0_58 = arith.constant 0 : index
    %170 = vector.load %arg11[%c0_56, %c0_57, %c0_58] : memref<1x64x32xbf16, #tpu.memory_space<vmem>>, vector<1x64x32xbf16>
    %171 = vector.shape_cast %170 : vector<1x64x32xbf16> to vector<64x32xbf16>
    %cst_59 = arith.constant dense<0.000000e+00> : vector<16x32xf32>
    %172 = tpu.matmul %169, %171, %cst_59 {dimension_numbers = #tpu.dot_dimension_numbers<[1], [0], [0], [1], [0, 0, 1, 1], [], []>} : vector<16x64xbf16>, vector<64x32xbf16>, vector<16x32xf32> -> vector<16x32xf32>
    %c0_60 = arith.constant 0 : index
    %c0_61 = arith.constant 0 : index
    %c0_62 = arith.constant 0 : index
    %173 = vector.load %arg12[%c0_60, %c0_61, %c0_62] : memref<1x1x32xf32, #tpu.memory_space<vmem>>, vector<1x1x32xf32>
    %174 = vector.shape_cast %173 : vector<1x1x32xf32> to vector<1x32xf32>
    %175 = vector.broadcast %174 : vector<1x32xf32> to vector<16x32xf32>
    %176 = arith.addf %172, %175 : vector<16x32xf32>
    %177 = arith.addf %132, %176 : vector<16x32xf32>
    %c1_i32 = arith.constant 1 : i32
    %178 = arith.cmpi eq, %arg1, %c1_i32 : i32
    %179 = arith.extui %178 : i1 to i32
    %c0_i32_63 = arith.constant 0 : i32
    %180 = arith.cmpi ne, %179, %c0_i32_63 : i32
    scf.if %180 {
      %c0_66 = arith.constant 0 : index
      %c0_67 = arith.constant 0 : index
      %184 = vector.load %arg13[%c0_66, %c0_67] : memref<1x32xf32, #tpu.memory_space<vmem>>, vector<1x32xf32>
      %c0_68 = arith.constant 0 : index
      %c0_69 = arith.constant 0 : index
      %185 = vector.load %arg14[%c0_68, %c0_69] : memref<1x32xf32, #tpu.memory_space<vmem>>, vector<1x32xf32>
      %cst_70 = arith.constant dense<0.000000e+00> : vector<16xf32>
      %186 = vector.multi_reduction <add>, %177, %cst_70 [1] : vector<16x32xf32> to vector<16xf32>
      %187 = vector.shape_cast %186 : vector<16xf32> to vector<16x1xf32>
      %cst_71 = arith.constant 3.200000e+01 : f32
      %188 = vector.broadcast %cst_71 : f32 to vector<16x1xf32>
      %189 = arith.divf %187, %188 : vector<16x1xf32>
      %190 = vector.broadcast %189 : vector<16x1xf32> to vector<16x32xf32>
      %191 = arith.subf %177, %190 : vector<16x32xf32>
      %192 = arith.mulf %191, %191 : vector<16x32xf32>
      %cst_72 = arith.constant dense<0.000000e+00> : vector<16xf32>
      %193 = vector.multi_reduction <add>, %192, %cst_72 [1] : vector<16x32xf32> to vector<16xf32>
      %194 = vector.shape_cast %193 : vector<16xf32> to vector<16x1xf32>
      %cst_73 = arith.constant 3.200000e+01 : f32
      %195 = vector.broadcast %cst_73 : f32 to vector<16x1xf32>
      %196 = arith.divf %194, %195 : vector<16x1xf32>
      %197 = vector.broadcast %189 : vector<16x1xf32> to vector<16x32xf32>
      %198 = arith.subf %177, %197 : vector<16x32xf32>
      %cst_74 = arith.constant 9.99999997E-7 : f32
      %199 = vector.broadcast %cst_74 : f32 to vector<16x1xf32>
      %200 = arith.addf %196, %199 : vector<16x1xf32>
      %201 = math.rsqrt %200 : vector<16x1xf32>
      %202 = vector.broadcast %201 : vector<16x1xf32> to vector<16x32xf32>
      %203 = arith.mulf %198, %202 : vector<16x32xf32>
      %204 = vector.broadcast %184 : vector<1x32xf32> to vector<16x32xf32>
      %205 = arith.mulf %203, %204 : vector<16x32xf32>
      %206 = vector.broadcast %185 : vector<1x32xf32> to vector<16x32xf32>
      %207 = arith.addf %205, %206 : vector<16x32xf32>
      %208 = vector.shape_cast %207 : vector<16x32xf32> to vector<2x8x32xf32>
      %c0_75 = arith.constant 0 : index
      %c0_76 = arith.constant 0 : index
      %c0_77 = arith.constant 0 : index
      %209 = vector.load %arg15[%c0_75, %c0_76, %c0_77] : memref<2x8x32xf32, #tpu.memory_space<vmem>>, vector<2x8x32xf32>
      tpu.vector_store %arg15[%c0_75, %c0_76, %c0_77], %208 {strides = array<i32>} : memref<2x8x32xf32, #tpu.memory_space<vmem>>, vector<2x8x32xf32>,
    } else {
    }
    %c1_i32_64 = arith.constant 1 : i32
    %181 = arith.cmpi slt, %arg1, %c1_i32_64 : i32
    %182 = arith.extui %181 : i1 to i32
    %c0_i32_65 = arith.constant 0 : i32
    %183 = arith.cmpi ne, %182, %c0_i32_65 : i32
    scf.if %183 {
      %184 = vector.shape_cast %177 : vector<16x32xf32> to vector<2x8x32xf32>
      %c0_66 = arith.constant 0 : index
      %c0_67 = arith.constant 0 : index
      %c0_68 = arith.constant 0 : index
      %185 = vector.load %arg15[%c0_66, %c0_67, %c0_68] : memref<2x8x32xf32, #tpu.memory_space<vmem>>, vector<2x8x32xf32>
      tpu.vector_store %arg15[%c0_66, %c0_67, %c0_68], %184 {strides = array<i32>} : memref<2x8x32xf32, #tpu.memory_space<vmem>>, vector<2x8x32xf32>,
    } else {
    }
    return
  }
  func.func @transform_0(%arg0: i32, %arg1: i32) -> (i32, i32, i32) {
    %c0_i32 = arith.constant 0 : i32
    %c0_i32_0 = arith.constant 0 : i32
    %c0_i32_1 = arith.constant 0 : i32
    return %arg0, %c0_i32, %c0_i32_0 : i32, i32, i32
  }
  func.func @transform_1(%arg0: i32, %arg1: i32) -> (i32, i32, i32) {
    %c0_i32 = arith.constant 0 : i32
    %c0_i32_0 = arith.constant 0 : i32
    %c0_i32_1 = arith.constant 0 : i32
    return %arg1, %c0_i32, %c0_i32_0 : i32, i32, i32
  }
  func.func @transform_2(%arg0: i32, %arg1: i32) -> (i32, i32, i32) {
    %c0_i32 = arith.constant 0 : i32
    %c0_i32_0 = arith.constant 0 : i32
    %c0_i32_1 = arith.constant 0 : i32
    return %arg1, %c0_i32, %c0_i32_0 : i32, i32, i32
  }
  func.func @transform_3(%arg0: i32, %arg1: i32) -> (i32, i32, i32) {
    %c0_i32 = arith.constant 0 : i32
    %c0_i32_0 = arith.constant 0 : i32
    %c0_i32_1 = arith.constant 0 : i32
    return %arg1, %c0_i32, %c0_i32_0 : i32, i32, i32
  }
  func.func @transform_4(%arg0: i32, %arg1: i32) -> (i32, i32, i32) {
    %c0_i32 = arith.constant 0 : i32
    %c0_i32_0 = arith.constant 0 : i32
    %c0_i32_1 = arith.constant 0 : i32
    return %arg1, %c0_i32, %c0_i32_0 : i32, i32, i32
  }
  func.func @transform_5(%arg0: i32, %arg1: i32) -> (i32, i32, i32) {
    %c0_i32 = arith.constant 0 : i32
    %c0_i32_0 = arith.constant 0 : i32
    %c0_i32_1 = arith.constant 0 : i32
    return %arg1, %c0_i32, %c0_i32_0 : i32, i32, i32
  }
  func.func @transform_6(%arg0: i32, %arg1: i32) -> (i32, i32, i32) {
    %c0_i32 = arith.constant 0 : i32
    %c0_i32_0 = arith.constant 0 : i32
    %c0_i32_1 = arith.constant 0 : i32
    return %arg1, %c0_i32, %c0_i32_0 : i32, i32, i32
  }
  func.func @transform_7(%arg0: i32, %arg1: i32) -> (i32, i32, i32) {
    %c0_i32 = arith.constant 0 : i32
    %c0_i32_0 = arith.constant 0 : i32
    %c0_i32_1 = arith.constant 0 : i32
    return %arg1, %c0_i32, %c0_i32_0 : i32, i32, i32
  }
  func.func @transform_8(%arg0: i32, %arg1: i32) -> (i32, i32, i32) {
    %c0_i32 = arith.constant 0 : i32
    %c0_i32_0 = arith.constant 0 : i32
    %c0_i32_1 = arith.constant 0 : i32
    return %arg1, %c0_i32, %c0_i32_0 : i32, i32, i32
  }
  func.func @transform_9(%arg0: i32, %arg1: i32) -> (i32, i32, i32) {
    %c0_i32 = arith.constant 0 : i32
    %c0_i32_0 = arith.constant 0 : i32
    %c0_i32_1 = arith.constant 0 : i32
    return %arg1, %c0_i32, %c0_i32_0 : i32, i32, i32
  }
  func.func @transform_10(%arg0: i32, %arg1: i32) -> (i32, i32, i32) {
    %c0_i32 = arith.constant 0 : i32
    %c0_i32_0 = arith.constant 0 : i32
    %c0_i32_1 = arith.constant 0 : i32
    return %arg1, %c0_i32, %c0_i32_0 : i32, i32, i32
  }
  func.func @transform_11(%arg0: i32, %arg1: i32) -> (i32, i32) {
    %c0_i32 = arith.constant 0 : i32
    %c0_i32_0 = arith.constant 0 : i32
    %c0_i32_1 = arith.constant 0 : i32
    return %c0_i32, %c0_i32_0 : i32, i32
  }
  func.func @transform_12(%arg0: i32, %arg1: i32) -> (i32, i32) {
    %c0_i32 = arith.constant 0 : i32
    %c0_i32_0 = arith.constant 0 : i32
    %c0_i32_1 = arith.constant 0 : i32
    return %c0_i32, %c0_i32_0 : i32, i32
  }
  func.func @transform_13(%arg0: i32, %arg1: i32) -> (i32, i32, i32) {
    %c0_i32 = arith.constant 0 : i32
    %c0_i32_0 = arith.constant 0 : i32
    %c0_i32_1 = arith.constant 0 : i32
    return %arg0, %c0_i32, %c0_i32_0 : i32, i32, i32
  }
}

</mosaic_0001>

<llo_original>
// kernel: tpu_custom_call.1
$region0: #{tpu_custom_call.1}
  #allocation0 [shape = 'u32[]', space=smem, size = 0x4, offset = 0x4, fixed_abs, tag = 'smem constant byte address 0x4 - core index']
  #allocation1 [shape = 'u32[144,128]{1,0:T(1,128)}', space=vmem, size = 0x12000, scoped, tag = 'internal scratch']
  %s0 = inlined_call_operand.vmem [shape: f32[4,8,32], index: 0, kind: input, shape index: {}]
  %s1 = inlined_call_operand.vmem [shape: f32[2,1,32], index: 1, kind: input, shape index: {}]
  %s2 = inlined_call_operand.hbm [shape: f32[2,1,32], index: 2, kind: input, shape index: {}]
  %s3 = inlined_call_operand.vmem [shape: bf16[2,32,96], index: 3, kind: input, shape index: {}]
  %s4 = inlined_call_operand.vmem [shape: bf16[2,32,32], index: 4, kind: input, shape index: {}]
  %s5 = inlined_call_operand.hbm [shape: f32[2,1,32], index: 5, kind: input, shape index: {}]
  %s6 = inlined_call_operand.hbm [shape: f32[2,1,32], index: 6, kind: input, shape index: {}]
  %s7 = inlined_call_operand.hbm [shape: bf16[2,32,64], index: 7, kind: input, shape index: {}]
  %s8 = inlined_call_operand.hbm [shape: f32[2,1,64], index: 8, kind: input, shape index: {}]
  %s9 = inlined_call_operand.vmem [shape: bf16[2,64,32], index: 9, kind: input, shape index: {}]
  %s10 = inlined_call_operand.vmem [shape: f32[2,1,32], index: 10, kind: input, shape index: {}]
  %s11 = inlined_call_operand.vmem [shape: f32[1,32], index: 11, kind: input, shape index: {}]
  %s12 = inlined_call_operand.vmem [shape: f32[1,32], index: 12, kind: input, shape index: {}]
  %s13 = inlined_call_operand.hbm [shape: f32[4,8,32], index: 13, kind: output, shape index: {}]
  %s14 = sld [smem:[#allocation0]]
  $region117: #{tpu_custom_call.1} parent=0
    _
  %s16 = ssub.s32 1, %s14
  %s17 = scalar_select 0, %s16, %s14
  $region1: #{tpu_custom_call.1} parent=0
    #allocation2 [shape = 'u8[1024]{0}', space=vmem, size = 0x400, scoped, tag = 'input window, operand 2']
    #allocation3 [shape = 's32[2]{0}', space=sflag, size = 0x8, scoped, tag = 'scoped memory for tpu_custom_call.1']
    #allocation4 [shape = 's32[2]{0}', space=sflag, size = 0x8, scoped, tag = 'scoped memory for tpu_custom_call.1']
    #allocation5 [shape = 'u8[1024]{0}', space=vmem, size = 0x400, scoped, tag = 'input window, operand 5']
    #allocation6 [shape = 's32[2]{0}', space=sflag, size = 0x8, scoped, tag = 'scoped memory for tpu_custom_call.1']
    #allocation7 [shape = 'u8[1024]{0}', space=vmem, size = 0x400, scoped, tag = 'input window, operand 6']
    #allocation8 [shape = 'u8[16384]{0}', space=vmem, size = 0x4000, scoped, tag = 'input window, operand 7']
    #allocation9 [shape = 's32[2]{0}', space=sflag, size = 0x8, scoped, tag = 'scoped memory for tpu_custom_call.1']
    #allocation10 [shape = 'u8[1024]{0}', space=vmem, size = 0x400, scoped, tag = 'input window, operand 8']
    #allocation11 [shape = 'u8[16384]{0}', space=vmem, size = 0x4000, scoped, tag = 'output window, operand 0']
    %18 = vsyncpa [#allocation3], 0
    %s19 = scalar_lea.sflag [#allocation3], 1
    %20 = vsyncpa %s19, 0
    %21 = vsyncpa [#allocation6], 0
    %s22 = scalar_lea.sflag [#allocation6], 1
    %23 = vsyncpa %s22, 0
    %24 = vsyncpa [#allocation9], 0
    %s25 = scalar_lea.sflag [#allocation9], 1
    %26 = vsyncpa %s25, 0
    %27 = vsyncpa [#allocation4], 0
    %s28 = scalar_lea.sflag [#allocation4], 1
    %29 = vsyncpa %s28, 0
    loop: start=0, step=1, limit=6
    $region2: #{tpu_custom_call.1} parent=1 // loop_pre_header
      _
    $region3: #{tpu_custom_call.1} parent=1 // loop_header
      %s31 = sphi 0, %s35
      %p32 = scmp.ge.s32.totalorder %s31, 6
      %s38 = sphi 0, %s50
      %s39 = sphi 0, %s46
      %s40 = sphi 0, %s38
      %s41 = sphi 0, %s39
      %s42 = sphi 0, %s40
      %s43 = sphi 0, %s41
      %s53 = sphi 0, %s55
      %s56 = sphi 0, %s53
      %s57 = sphi 0, %s56
      %s73 = sphi 0, %s57
      %s79 = sphi 0, %s81
      %s82 = sphi 0, %s79
      %s83 = sphi 0, %s82
      %s99 = sphi 0, %s83
      %s105 = sphi 0, %s107
      %s108 = sphi 0, %s105
      %s109 = sphi 0, %s108
      %s125 = sphi 0, %s109
      %s131 = sphi 0, %s133
      %s134 = sphi 0, %s131
      %s135 = sphi 0, %s134
      %s151 = sphi 0, %s135
      %s157 = sphi 0, %s159
      %s160 = sphi 0, %s157
      %s161 = sphi 0, %s160
      %s177 = sphi 0, %s161
      %s183 = sphi 0, %s185
      %s186 = sphi 0, %s183
      %s187 = sphi 0, %s186
      %s203 = sphi 0, %s187
      %s209 = sphi 0, %s211
      %s212 = sphi 0, %s209
      %s213 = sphi 0, %s212
      %s229 = sphi 0, %s213
      %s235 = sphi 0, %s237
      %s238 = sphi 0, %s235
      %s239 = sphi 0, %s238
      %s255 = sphi 0, %s239
      %s261 = sphi 0, %s263
      %s264 = sphi 0, %s261
      %s265 = sphi 0, %s264
      %s281 = sphi 0, %s265
      %s287 = sphi 0, %s289
      %s290 = sphi 0, %s287
      %s291 = sphi 0, %s290
      %s307 = sphi 0, %s291
      %s313 = sphi 0, %s315
      %s316 = sphi 0, %s313
      %s317 = sphi 0, %s316
      %s333 = sphi 0, %s317
      %s337 = sphi 0, %s337
      %s339 = sphi 0, %s337
      %s340 = sphi 0, %s339
      %s354 = sphi 0, %s340
      %s358 = sphi 0, %s358
      %s360 = sphi 0, %s358
      %s361 = sphi 0, %s360
      %s375 = sphi 0, %s361
      %s381 = sphi 0, %s383
      %s384 = sphi 0, %s381
      %s385 = sphi 0, %s384
      %s401 = sphi 0, %s385
    $region4: #{tpu_custom_call.1} parent=1 // loop_header_branch
      %34 = sbr.rel (%p32) target = $region8
    $region5: #{tpu_custom_call.1} parent=1 // loop_body
      %s36 = ssub.s32 %s31, 1
      %s37 = ssub.s32 %s31, 2
      %s44 = sadd.s32 1, %s39
      %p45 = scmp.ge.s32.totalorder %s44, 2
      %s46 = scalar_select %p45, 0, %s44
      %s47 = sadd.s32 1, %s38
      %s48 = scalar_select %p45, %s47, %s38
      %p49 = scmp.ge.s32.totalorder %s48, 2
      %s50 = scalar_select %p49, 0, %s48
      %s51 = ssub.s32 %s38, %s50
      %p52 = scmp.eq.s32.totalorder %s51, 0
      %s54 = sadd.s32 %s53, 1
      %s55 = scalar_select %p52, %s53, %s54
      %p58 = pneg %p52
      %p59 = scmp.eq.s32.totalorder %s31, 3
      %p60 = por %p58, %p59
      %p61 = scmp.ne.s32.totalorder %s53, %s56
      %p62 = scmp.eq.s32.totalorder %s31, 0
      %p63 = por %p61, %p62
      %p64 = scmp.ne.s32.totalorder %s53, %s56
      %p65 = scmp.eq.s32.totalorder %s36, 3
      %p66 = por %p64, %p65
      %p67 = scmp.ne.s32.totalorder %s56, %s57
      %p68 = scmp.eq.s32.totalorder %s36, 0
      %p69 = por %p67, %p68
      %p70 = scmp.ne.s32.totalorder %s56, %s57
      %p71 = scmp.eq.s32.totalorder %s37, 3
      %p72 = por %p70, %p71
      %p74 = scmp.ne.s32.totalorder %s57, %s73
      %p75 = scmp.eq.s32.totalorder %s37, 0
      %p76 = por %p74, %p75
      %s77 = ssub.s32 %s39, %s46
      %p78 = scmp.eq.s32.totalorder %s77, 0
      %s80 = sadd.s32 %s79, 1
      %s81 = scalar_select %p78, %s79, %s80
      %p84 = pneg %p78
      %p85 = scmp.eq.s32.totalorder %s31, 3
      %p86 = por %p84, %p85
      %p87 = scmp.ne.s32.totalorder %s79, %s82
      %p88 = scmp.eq.s32.totalorder %s31, 0
      %p89 = por %p87, %p88
      %p90 = scmp.ne.s32.totalorder %s79, %s82
      %p91 = scmp.eq.s32.totalorder %s36, 3
      %p92 = por %p90, %p91
      %p93 = scmp.ne.s32.totalorder %s82, %s83
      %p94 = scmp.eq.s32.totalorder %s36, 0
      %p95 = por %p93, %p94
      %p96 = scmp.ne.s32.totalorder %s82, %s83
      %p97 = scmp.eq.s32.totalorder %s37, 3
      %p98 = por %p96, %p97
      %p100 = scmp.ne.s32.totalorder %s83, %s99
      %p101 = scmp.eq.s32.totalorder %s37, 0
      %p102 = por %p100, %p101
      %s103 = ssub.s32 %s39, %s46
      %p104 = scmp.eq.s32.totalorder %s103, 0
      %s106 = sadd.s32 %s105, 1
      %s107 = scalar_select %p104, %s105, %s106
      %p110 = pneg %p104
      %p111 = scmp.eq.s32.totalorder %s31, 3
      %p112 = por %p110, %p111
      %p113 = scmp.ne.s32.totalorder %s105, %s108
      %p114 = scmp.eq.s32.totalorder %s31, 0
      %p115 = por %p113, %p114
      %p116 = scmp.ne.s32.totalorder %s105, %s108
      %p117 = scmp.eq.s32.totalorder %s36, 3
      %p118 = por %p116, %p117
      %p119 = scmp.ne.s32.totalorder %s108, %s109
      %p120 = scmp.eq.s32.totalorder %s36, 0
      %p121 = por %p119, %p120
      %p122 = scmp.ne.s32.totalorder %s108, %s109
      %p123 = scmp.eq.s32.totalorder %s37, 3
      %p124 = por %p122, %p123
      %p126 = scmp.ne.s32.totalorder %s109, %s125
      %p127 = scmp.eq.s32.totalorder %s37, 0
      %p128 = por %p126, %p127
      %s129 = ssub.s32 %s39, %s46
      %p130 = scmp.eq.s32.totalorder %s129, 0
      %s132 = sadd.s32 %s131, 1
      %s133 = scalar_select %p130, %s131, %s132
      %p136 = pneg %p130
      %p137 = scmp.eq.s32.totalorder %s31, 3
      %p138 = por %p136, %p137
      %p139 = scmp.ne.s32.totalorder %s131, %s134
      %p140 = scmp.eq.s32.totalorder %s31, 0
      %p141 = por %p139, %p140
      %p142 = scmp.ne.s32.totalorder %s131, %s134
      %p143 = scmp.eq.s32.totalorder %s36, 3
      %p144 = por %p142, %p143
      %p145 = scmp.ne.s32.totalorder %s134, %s135
      %p146 = scmp.eq.s32.totalorder %s36, 0
      %p147 = por %p145, %p146
      %p148 = scmp.ne.s32.totalorder %s134, %s135
      %p149 = scmp.eq.s32.totalorder %s37, 3
      %p150 = por %p148, %p149
      %p152 = scmp.ne.s32.totalorder %s135, %s151
      %p153 = scmp.eq.s32.totalorder %s37, 0
      %p154 = por %p152, %p153
      %s155 = ssub.s32 %s39, %s46
      %p156 = scmp.eq.s32.totalorder %s155, 0
      %s158 = sadd.s32 %s157, 1
      %s159 = scalar_select %p156, %s157, %s158
      %p162 = pneg %p156
      %p163 = scmp.eq.s32.totalorder %s31, 3
      %p164 = por %p162, %p163
      %p165 = scmp.ne.s32.totalorder %s157, %s160
      %p166 = scmp.eq.s32.totalorder %s31, 0
      %p167 = por %p165, %p166
      %p168 = scmp.ne.s32.totalorder %s157, %s160
      %p169 = scmp.eq.s32.totalorder %s36, 3
      %p170 = por %p168, %p169
      %p171 = scmp.ne.s32.totalorder %s160, %s161
      %p172 = scmp.eq.s32.totalorder %s36, 0
      %p173 = por %p171, %p172
      %p174 = scmp.ne.s32.totalorder %s160, %s161
      %p175 = scmp.eq.s32.totalorder %s37, 3
      %p176 = por %p174, %p175
      %p178 = scmp.ne.s32.totalorder %s161, %s177
      %p179 = scmp.eq.s32.totalorder %s37, 0
      %p180 = por %p178, %p179
      %s181 = ssub.s32 %s39, %s46
      %p182 = scmp.eq.s32.totalorder %s181, 0
      %s184 = sadd.s32 %s183, 1
      %s185 = scalar_select %p182, %s183, %s184
      %p188 = pneg %p182
      %p189 = scmp.eq.s32.totalorder %s31, 3
      %p190 = por %p188, %p189
      %p191 = scmp.ne.s32.totalorder %s183, %s186
      %p192 = scmp.eq.s32.totalorder %s31, 0
      %p193 = por %p191, %p192
      %p194 = scmp.ne.s32.totalorder %s183, %s186
      %p195 = scmp.eq.s32.totalorder %s36, 3
      %p196 = por %p194, %p195
      %p197 = scmp.ne.s32.totalorder %s186, %s187
      %p198 = scmp.eq.s32.totalorder %s36, 0
      %p199 = por %p197, %p198
      %p200 = scmp.ne.s32.totalorder %s186, %s187
      %p201 = scmp.eq.s32.totalorder %s37, 3
      %p202 = por %p200, %p201
      %p204 = scmp.ne.s32.totalorder %s187, %s203
      %p205 = scmp.eq.s32.totalorder %s37, 0
      %p206 = por %p204, %p205
      %s207 = ssub.s32 %s39, %s46
      %p208 = scmp.eq.s32.totalorder %s207, 0
      %s210 = sadd.s32 %s209, 1
      %s211 = scalar_select %p208, %s209, %s210
      %p214 = pneg %p208
      %p215 = scmp.eq.s32.totalorder %s31, 3
      %p216 = por %p214, %p215
      %p217 = scmp.ne.s32.totalorder %s209, %s212
      %p218 = scmp.eq.s32.totalorder %s31, 0
      %p219 = por %p217, %p218
      %p220 = scmp.ne.s32.totalorder %s209, %s212
      %p221 = scmp.eq.s32.totalorder %s36, 3
      %p222 = por %p220, %p221
      %p223 = scmp.ne.s32.totalorder %s212, %s213
      %p224 = scmp.eq.s32.totalorder %s36, 0
      %p225 = por %p223, %p224
      %p226 = scmp.ne.s32.totalorder %s212, %s213
      %p227 = scmp.eq.s32.totalorder %s37, 3
      %p228 = por %p226, %p227
      %p230 = scmp.ne.s32.totalorder %s213, %s229
      %p231 = scmp.eq.s32.totalorder %s37, 0
      %p232 = por %p230, %p231
      %s233 = ssub.s32 %s39, %s46
      %p234 = scmp.eq.s32.totalorder %s233, 0
      %s236 = sadd.s32 %s235, 1
      %s237 = scalar_select %p234, %s235, %s236
      %p240 = pneg %p234
      %p241 = scmp.eq.s32.totalorder %s31, 3
      %p242 = por %p240, %p241
      %p243 = scmp.ne.s32.totalorder %s235, %s238
      %p244 = scmp.eq.s32.totalorder %s31, 0
      %p245 = por %p243, %p244
      %p246 = scmp.ne.s32.totalorder %s235, %s238
      %p247 = scmp.eq.s32.totalorder %s36, 3
      %p248 = por %p246, %p247
      %p249 = scmp.ne.s32.totalorder %s238, %s239
      %p250 = scmp.eq.s32.totalorder %s36, 0
      %p251 = por %p249, %p250
      %p252 = scmp.ne.s32.totalorder %s238, %s239
      %p253 = scmp.eq.s32.totalorder %s37, 3
      %p254 = por %p252, %p253
      %p256 = scmp.ne.s32.totalorder %s239, %s255
      %p257 = scmp.eq.s32.totalorder %s37, 0
      %p258 = por %p256, %p257
      %s259 = ssub.s32 %s39, %s46
      %p260 = scmp.eq.s32.totalorder %s259, 0
      %s262 = sadd.s32 %s261, 1
      %s263 = scalar_select %p260, %s261, %s262
      %p266 = pneg %p260
      %p267 = scmp.eq.s32.totalorder %s31, 3
      %p268 = por %p266, %p267
      %p269 = scmp.ne.s32.totalorder %s261, %s264
      %p270 = scmp.eq.s32.totalorder %s31, 0
      %p271 = por %p269, %p270
      %p272 = scmp.ne.s32.totalorder %s261, %s264
      %p273 = scmp.eq.s32.totalorder %s36, 3
      %p274 = por %p272, %p273
      %p275 = scmp.ne.s32.totalorder %s264, %s265
      %p276 = scmp.eq.s32.totalorder %s36, 0
      %p277 = por %p275, %p276
      %p278 = scmp.ne.s32.totalorder %s264, %s265
      %p279 = scmp.eq.s32.totalorder %s37, 3
      %p280 = por %p278, %p279
      %p282 = scmp.ne.s32.totalorder %s265, %s281
      %p283 = scmp.eq.s32.totalorder %s37, 0
      %p284 = por %p282, %p283
      %s285 = ssub.s32 %s39, %s46
      %p286 = scmp.eq.s32.totalorder %s285, 0
      %s288 = sadd.s32 %s287, 1
      %s289 = scalar_select %p286, %s287, %s288
      %p292 = pneg %p286
      %p293 = scmp.eq.s32.totalorder %s31, 3
      %p294 = por %p292, %p293
      %p295 = scmp.ne.s32.totalorder %s287, %s290
      %p296 = scmp.eq.s32.totalorder %s31, 0
      %p297 = por %p295, %p296
      %p298 = scmp.ne.s32.totalorder %s287, %s290
      %p299 = scmp.eq.s32.totalorder %s36, 3
      %p300 = por %p298, %p299
      %p301 = scmp.ne.s32.totalorder %s290, %s291
      %p302 = scmp.eq.s32.totalorder %s36, 0
      %p303 = por %p301, %p302
      %p304 = scmp.ne.s32.totalorder %s290, %s291
      %p305 = scmp.eq.s32.totalorder %s37, 3
      %p306 = por %p304, %p305
      %p308 = scmp.ne.s32.totalorder %s291, %s307
      %p309 = scmp.eq.s32.totalorder %s37, 0
      %p310 = por %p308, %p309
      %s311 = ssub.s32 %s39, %s46
      %p312 = scmp.eq.s32.totalorder %s311, 0
      %s314 = sadd.s32 %s313, 1
      %s315 = scalar_select %p312, %s313, %s314
      %p318 = pneg %p312
      %p319 = scmp.eq.s32.totalorder %s31, 3
      %p320 = por %p318, %p319
      %p321 = scmp.ne.s32.totalorder %s313, %s316
      %p322 = scmp.eq.s32.totalorder %s31, 0
      %p323 = por %p321, %p322
      %p324 = scmp.ne.s32.totalorder %s313, %s316
      %p325 = scmp.eq.s32.totalorder %s36, 3
      %p326 = por %p324, %p325
      %p327 = scmp.ne.s32.totalorder %s316, %s317
      %p328 = scmp.eq.s32.totalorder %s36, 0
      %p329 = por %p327, %p328
      %p330 = scmp.ne.s32.totalorder %s316, %s317
      %p331 = scmp.eq.s32.totalorder %s37, 3
      %p332 = por %p330, %p331
      %p334 = scmp.ne.s32.totalorder %s317, %s333
      %p335 = scmp.eq.s32.totalorder %s37, 0
      %p336 = por %p334, %p335
      %s338 = sadd.s32 %s337, 1
      %p341 = scmp.eq.s32.totalorder %s31, 3
      %p342 = scmp.ne.s32.totalorder %s337, %s339
      %p343 = scmp.eq.s32.totalorder %s31, 0
      %p344 = por %p342, %p343
      %p345 = scmp.ne.s32.totalorder %s337, %s339
      %p346 = scmp.eq.s32.totalorder %s36, 3
      %p347 = por %p345, %p346
      %p348 = scmp.ne.s32.totalorder %s339, %s340
      %p349 = scmp.eq.s32.totalorder %s36, 0
      %p350 = por %p348, %p349
      %p351 = scmp.ne.s32.totalorder %s339, %s340
      %p352 = scmp.eq.s32.totalorder %s37, 3
      %p353 = por %p351, %p352
      %p355 = scmp.ne.s32.totalorder %s340, %s354
      %p356 = scmp.eq.s32.totalorder %s37, 0
      %p357 = por %p355, %p356
      %s359 = sadd.s32 %s358, 1
      %p362 = scmp.eq.s32.totalorder %s31, 3
      %p363 = scmp.ne.s32.totalorder %s358, %s360
      %p364 = scmp.eq.s32.totalorder %s31, 0
      %p365 = por %p363, %p364
      %p366 = scmp.ne.s32.totalorder %s358, %s360
      %p367 = scmp.eq.s32.totalorder %s36, 3
      %p368 = por %p366, %p367
      %p369 = scmp.ne.s32.totalorder %s360, %s361
      %p370 = scmp.eq.s32.totalorder %s36, 0
      %p371 = por %p369, %p370
      %p372 = scmp.ne.s32.totalorder %s360, %s361
      %p373 = scmp.eq.s32.totalorder %s37, 3
      %p374 = por %p372, %p373
      %p376 = scmp.ne.s32.totalorder %s361, %s375
      %p377 = scmp.eq.s32.totalorder %s37, 0
      %p378 = por %p376, %p377
      %s379 = ssub.s32 %s38, %s50
      %p380 = scmp.eq.s32.totalorder %s379, 0
      %s382 = sadd.s32 %s381, 1
      %s383 = scalar_select %p380, %s381, %s382
      %p386 = pneg %p380
      %p387 = scmp.eq.s32.totalorder %s31, 3
      %p388 = por %p386, %p387
      %p389 = scmp.ne.s32.totalorder %s381, %s384
      %p390 = scmp.eq.s32.totalorder %s31, 0
      %p391 = por %p389, %p390
      %p392 = scmp.ne.s32.totalorder %s381, %s384
      %p393 = scmp.eq.s32.totalorder %s36, 3
      %p394 = por %p392, %p393
      %p395 = scmp.ne.s32.totalorder %s384, %s385
      %p396 = scmp.eq.s32.totalorder %s36, 0
      %p397 = por %p395, %p396
      %p398 = scmp.ne.s32.totalorder %s384, %s385
      %p399 = scmp.eq.s32.totalorder %s37, 3
      %p400 = por %p398, %p399
      %p402 = scmp.ne.s32.totalorder %s385, %s401
      %p403 = scmp.eq.s32.totalorder %s37, 0
      %p404 = por %p402, %p403
      %p405 = scmp.le.s32.totalorder 1, %s31
      %p406 = scmp.lt.s32.totalorder %s31, 5
      %p407 = pnand %p405, %p406
      %p408 = pneg %p407
      // Predicated region
      $region9: #{tpu_custom_call.1} parent=5 // pred_check
        _
      $region10: #{tpu_custom_call.1} parent=5 // pred_check_branch
        %410 = sbr.rel (%p407) target = $region12
      $region11: #{tpu_custom_call.1} parent=5 // pred_region
        %s411 = ssub.s32 %s31, 1
        // Predicated region
        $region13: #{tpu_custom_call.1} parent=11 // pred_check
          %p412 = pneg %p350
        $region14: #{tpu_custom_call.1} parent=11 // pred_check_branch
          %414 = sbr.rel (%p412) target = $region16
        $region15: #{tpu_custom_call.1} parent=11 // pred_region
          _
        $region16: #{tpu_custom_call.1} parent=11 // pred_fallthru
          _
        // Predicated region
        $region17: #{tpu_custom_call.1} parent=11 // pred_check
          %p415 = pneg %p371
        $region18: #{tpu_custom_call.1} parent=11 // pred_check_branch
          %417 = sbr.rel (%p415) target = $region20
        $region19: #{tpu_custom_call.1} parent=11 // pred_region
          _
        $region20: #{tpu_custom_call.1} parent=11 // pred_fallthru
          _
      $region12: #{tpu_custom_call.1} parent=5 // pred_fallthru
        _
      %p418 = scmp.lt.s32.totalorder %s31, 4
      // Predicated region
      $region21: #{tpu_custom_call.1} parent=5 // pred_check
        %p419 = pneg %p418
      $region22: #{tpu_custom_call.1} parent=5 // pred_check_branch
        %421 = sbr.rel (%p419) target = $region24
      $region23: #{tpu_custom_call.1} parent=5 // pred_region
        // Predicated region
        $region25: #{tpu_custom_call.1} parent=23 // pred_check
          %p422 = pneg %p63
        $region26: #{tpu_custom_call.1} parent=23 // pred_check_branch
          %424 = sbr.rel (%p422) target = $region28
        $region27: #{tpu_custom_call.1} parent=23 // pred_region
          %s425 = smul.u32 2, %s38
          %p426 = scmp.lt.s32.totalorder %s425, 3
          %s427 = scalar_select %p426, %s425, 3
          %s428 = smul.addr %s427, 8
          %s429 = scalar_lea.vmem %s0, %s428
          %s430 = smul.u32 2, %s38
        $region28: #{tpu_custom_call.1} parent=23 // pred_fallthru
          _
        // Predicated region
        $region29: #{tpu_custom_call.1} parent=23 // pred_check
          %p431 = pneg %p89
        $region30: #{tpu_custom_call.1} parent=23 // pred_check_branch
          %433 = sbr.rel (%p431) target = $region32
        $region31: #{tpu_custom_call.1} parent=23 // pred_region
          %p434 = scmp.lt.s32.totalorder %s39, 1
          %s435 = scalar_select %p434, %s39, 1
          %s436 = scalar_lea.vmem %s1, %s435
        $region32: #{tpu_custom_call.1} parent=23 // pred_fallthru
          _
        // Predicated region
        $region33: #{tpu_custom_call.1} parent=23 // pred_check
          %p437 = pneg %p115
        $region34: #{tpu_custom_call.1} parent=23 // pred_check_branch
          %439 = sbr.rel (%p437) target = $region36
        $region35: #{tpu_custom_call.1} parent=23 // pred_region
          %s440 = sand.u32 %s105, 1
          %s441 = scalar_lea.sflag [#allocation3], %s440
          %s442 = sand.u32 %s105, 1
          %s443 = scalar_lea.vmem [#allocation2], %s442
          %s445 = ssub.s32 16, 16
          %446 = vsyncadd %s441, %s445
          %s447 = smul.addr %s39, 16
          %s448 = scalar_lea.hbm %s2, %s447
          %s450 = sshll.u32 %s443, 4
          %s451 = int_to_ptr.vmem [resolvable:$true] %s450
          %453 = dma.hbm_to_vmem [thread:$0]  %s448, 16, %s451, %s441
        $region36: #{tpu_custom_call.1} parent=23 // pred_fallthru
          _
        // Predicated region
        $region37: #{tpu_custom_call.1} parent=23 // pred_check
          %p454 = pneg %p141
        $region38: #{tpu_custom_call.1} parent=23 // pred_check_branch
          %456 = sbr.rel (%p454) target = $region40
        $region39: #{tpu_custom_call.1} parent=23 // pred_region
          %p457 = scmp.lt.s32.totalorder %s39, 1
          %s458 = scalar_select %p457, %s39, 1
          %s459 = smul.addr %s458, 4
          %s460 = smul.addr %s459, 4
          %s461 = scalar_lea.vmem %s3, %s460
        $region40: #{tpu_custom_call.1} parent=23 // pred_fallthru
          _
        // Predicated region
        $region41: #{tpu_custom_call.1} parent=23 // pred_check
          %p462 = pneg %p167
        $region42: #{tpu_custom_call.1} parent=23 // pred_check_branch
          %464 = sbr.rel (%p462) target = $region44
        $region43: #{tpu_custom_call.1} parent=23 // pred_region
          %p465 = scmp.lt.s32.totalorder %s39, 1
          %s466 = scalar_select %p465, %s39, 1
          %s467 = smul.addr %s466, 4
          %s468 = smul.addr %s467, 4
          %s469 = scalar_lea.vmem %s4, %s468
        $region44: #{tpu_custom_call.1} parent=23 // pred_fallthru
          _
        // Predicated region
        $region45: #{tpu_custom_call.1} parent=23 // pred_check
          %p470 = pneg %p193
        $region46: #{tpu_custom_call.1} parent=23 // pred_check_branch
          %472 = sbr.rel (%p470) target = $region48
        $region47: #{tpu_custom_call.1} parent=23 // pred_region
          %s473 = sand.u32 %s31, 1
          %s474 = scalar_lea.sflag [#allocation6], %s473
          %s475 = sand.u32 %s183, 1
          %s476 = scalar_lea.vmem [#allocation5], %s475
          %s478 = ssub.s32 16, 16
          %479 = vsyncadd %s474, %s478
          %s480 = smul.addr %s39, 16
          %s481 = scalar_lea.hbm %s5, %s480
          %s483 = sshll.u32 %s476, 4
          %s484 = int_to_ptr.vmem [resolvable:$true] %s483
          %486 = dma.hbm_to_vmem [thread:$0]  %s481, 16, %s484, %s474
        $region48: #{tpu_custom_call.1} parent=23 // pred_fallthru
          _
        // Predicated region
        $region49: #{tpu_custom_call.1} parent=23 // pred_check
          %p487 = pneg %p219
        $region50: #{tpu_custom_call.1} parent=23 // pred_check_branch
          %489 = sbr.rel (%p487) target = $region52
        $region51: #{tpu_custom_call.1} parent=23 // pred_region
          %s490 = sand.u32 %s31, 1
          %s491 = scalar_lea.sflag [#allocation6], %s490
          %s492 = sand.u32 %s209, 1
          %s493 = scalar_lea.vmem [#allocation7], %s492
          %s495 = ssub.s32 16, 16
          %496 = vsyncadd %s491, %s495
          %s497 = smul.addr %s39, 16
          %s498 = scalar_lea.hbm %s6, %s497
          %s500 = sshll.u32 %s493, 4
          %s501 = int_to_ptr.vmem [resolvable:$true] %s500
          %503 = dma.hbm_to_vmem [thread:$0]  %s498, 16, %s501, %s491
        $region52: #{tpu_custom_call.1} parent=23 // pred_fallthru
          _
        // Predicated region
        $region53: #{tpu_custom_call.1} parent=23 // pred_check
          %p504 = pneg %p245
        $region54: #{tpu_custom_call.1} parent=23 // pred_check_branch
          %506 = sbr.rel (%p504) target = $region56
        $region55: #{tpu_custom_call.1} parent=23 // pred_region
          %s507 = sand.u32 %s31, 1
          %s508 = scalar_lea.sflag [#allocation9], %s507
          %s509 = sand.u32 %s235, 1
          %s510 = smul.addr %s509, 16
          %s511 = scalar_lea.vmem [#allocation8], %s510
          %s513 = ssub.s32 256, 256
          %514 = vsyncadd %s508, %s513
          %s515 = smul.addr %s39, 4
          %s516 = smul.addr %s515, 64
          %s517 = scalar_lea.hbm %s7, %s516
          %s518 = sshll.u32 %s511, 4
          %s519 = int_to_ptr.vmem [resolvable:$true] %s518
          %524 = dma.hbm_to_vmem [thread:$0]  %s517, 256, %s519, %s508, 64, 64, 4
        $region56: #{tpu_custom_call.1} parent=23 // pred_fallthru
          _
        // Predicated region
        $region57: #{tpu_custom_call.1} parent=23 // pred_check
          %p525 = pneg %p271
        $region58: #{tpu_custom_call.1} parent=23 // pred_check_branch
          %527 = sbr.rel (%p525) target = $region60
        $region59: #{tpu_custom_call.1} parent=23 // pred_region
          %s528 = sand.u32 %s31, 1
          %s529 = scalar_lea.sflag [#allocation9], %s528
          %s530 = sand.u32 %s261, 1
          %s531 = scalar_lea.vmem [#allocation10], %s530
          %s533 = ssub.s32 16, 16
          %534 = vsyncadd %s529, %s533
          %s535 = smul.addr %s39, 16
          %s536 = scalar_lea.hbm %s8, %s535
          %s538 = sshll.u32 %s531, 4
          %s539 = int_to_ptr.vmem [resolvable:$true] %s538
          %541 = dma.hbm_to_vmem [thread:$0]  %s536, 16, %s539, %s529
        $region60: #{tpu_custom_call.1} parent=23 // pred_fallthru
          _
        // Predicated region
        $region61: #{tpu_custom_call.1} parent=23 // pred_check
          %p542 = pneg %p297
        $region62: #{tpu_custom_call.1} parent=23 // pred_check_branch
          %544 = sbr.rel (%p542) target = $region64
        $region63: #{tpu_custom_call.1} parent=23 // pred_region
          %p545 = scmp.lt.s32.totalorder %s39, 1
          %s546 = scalar_select %p545, %s39, 1
          %s547 = smul.addr %s546, 8
          %s548 = smul.addr %s547, 4
          %s549 = scalar_lea.vmem %s9, %s548
        $region64: #{tpu_custom_call.1} parent=23 // pred_fallthru
          _
        // Predicated region
        $region65: #{tpu_custom_call.1} parent=23 // pred_check
          %p550 = pneg %p323
        $region66: #{tpu_custom_call.1} parent=23 // pred_check_branch
          %552 = sbr.rel (%p550) target = $region68
        $region67: #{tpu_custom_call.1} parent=23 // pred_region
          %p553 = scmp.lt.s32.totalorder %s39, 1
          %s554 = scalar_select %p553, %s39, 1
          %s555 = scalar_lea.vmem %s10, %s554
        $region68: #{tpu_custom_call.1} parent=23 // pred_fallthru
          _
      $region24: #{tpu_custom_call.1} parent=5 // pred_fallthru
        _
      %p556 = scmp.le.s32.totalorder 1, %s31
      %p557 = scmp.lt.s32.totalorder %s31, 5
      %p558 = pnand %p556, %p557
      %p559 = pneg %p558
      // Predicated region
      $region69: #{tpu_custom_call.1} parent=5 // pred_check
        _
      $region70: #{tpu_custom_call.1} parent=5 // pred_check_branch
        %561 = sbr.rel (%p558) target = $region72
      $region71: #{tpu_custom_call.1} parent=5 // pred_region
        %s562 = ssub.s32 %s31, 1
        %s563 = sand.u32 %s108, 1
        %s564 = scalar_lea.sflag [#allocation3], %s563
        %s565 = sand.u32 %s108, 1
        %s566 = scalar_lea.vmem [#allocation2], %s565
        // Predicated region
        $region73: #{tpu_custom_call.1} parent=71 // pred_check
          %p567 = pneg %p121
        $region74: #{tpu_custom_call.1} parent=71 // pred_check_branch
          %569 = sbr.rel (%p567) target = $region76
        $region75: #{tpu_custom_call.1} parent=71 // pred_region
          %570 = dma.done %s564, 16
        $region76: #{tpu_custom_call.1} parent=71 // pred_fallthru
          _
        %s571 = sand.u32 %s36, 1
        %s572 = scalar_lea.sflag [#allocation6], %s571
        %s573 = sand.u32 %s186, 1
        %s574 = scalar_lea.vmem [#allocation5], %s573
        // Predicated region
        $region77: #{tpu_custom_call.1} parent=71 // pred_check
          %p575 = pneg %p199
        $region78: #{tpu_custom_call.1} parent=71 // pred_check_branch
          %577 = sbr.rel (%p575) target = $region80
        $region79: #{tpu_custom_call.1} parent=71 // pred_region
          %578 = dma.done %s572, 16
        $region80: #{tpu_custom_call.1} parent=71 // pred_fallthru
          _
        %s579 = sand.u32 %s36, 1
        %s580 = scalar_lea.sflag [#allocation6], %s579
        %s581 = sand.u32 %s212, 1
        %s582 = scalar_lea.vmem [#allocation7], %s581
        // Predicated region
        $region81: #{tpu_custom_call.1} parent=71 // pred_check
          %p583 = pneg %p225
        $region82: #{tpu_custom_call.1} parent=71 // pred_check_branch
          %585 = sbr.rel (%p583) target = $region84
        $region83: #{tpu_custom_call.1} parent=71 // pred_region
          %586 = dma.done %s580, 16
        $region84: #{tpu_custom_call.1} parent=71 // pred_fallthru
          _
        %s587 = sand.u32 %s36, 1
        %s588 = scalar_lea.sflag [#allocation9], %s587
        %s589 = sand.u32 %s238, 1
        %s590 = smul.addr %s589, 16
        %s591 = scalar_lea.vmem [#allocation8], %s590
        // Predicated region
        $region85: #{tpu_custom_call.1} parent=71 // pred_check
          %p592 = pneg %p251
        $region86: #{tpu_custom_call.1} parent=71 // pred_check_branch
          %594 = sbr.rel (%p592) target = $region88
        $region87: #{tpu_custom_call.1} parent=71 // pred_region
          %595 = dma.done %s588, 256
        $region88: #{tpu_custom_call.1} parent=71 // pred_fallthru
          _
        %s596 = sand.u32 %s36, 1
        %s597 = scalar_lea.sflag [#allocation9], %s596
        %s598 = sand.u32 %s264, 1
        %s599 = scalar_lea.vmem [#allocation10], %s598
        // Predicated region
        $region89: #{tpu_custom_call.1} parent=71 // pred_check
          %p600 = pneg %p277
        $region90: #{tpu_custom_call.1} parent=71 // pred_check_branch
          %602 = sbr.rel (%p600) target = $region92
        $region91: #{tpu_custom_call.1} parent=71 // pred_region
          %603 = dma.done %s597, 16
        $region92: #{tpu_custom_call.1} parent=71 // pred_fallthru
          _
        %s604 = smul.u32 2, %s40
        %p605 = scmp.lt.s32.totalorder %s604, 3
        %s606 = scalar_select %p605, %s604, 3
        %s607 = smul.addr %s606, 8
        %s608 = scalar_lea.vmem %s0, %s607
        %p609 = pneg %p69
        %p610 = pneg %p66
        %p611 = scmp.lt.s32.totalorder %s41, 1
        %s612 = scalar_select %p611, %s41, 1
        %s613 = scalar_lea.vmem %s1, %s612
        %p614 = pneg %p95
        %p615 = pneg %p92
        %s616 = sand.u32 %s108, 1
        %s617 = scalar_lea.sflag [#allocation3], %s616
        %s618 = sand.u32 %s108, 1
        %s619 = scalar_lea.vmem [#allocation2], %s618
        %p620 = pneg %p121
        %p621 = pneg %p118
        %p622 = scmp.lt.s32.totalorder %s41, 1
        %s623 = scalar_select %p622, %s41, 1
        %s624 = smul.addr %s623, 4
        %s625 = smul.addr %s624, 4
        %s626 = scalar_lea.vmem %s3, %s625
        %p627 = pneg %p147
        %p628 = pneg %p144
        %p629 = scmp.lt.s32.totalorder %s41, 1
        %s630 = scalar_select %p629, %s41, 1
        %s631 = smul.addr %s630, 4
        %s632 = smul.addr %s631, 4
        %s633 = scalar_lea.vmem %s4, %s632
        %p634 = pneg %p173
        %p635 = pneg %p170
        %s636 = sand.u32 %s36, 1
        %s637 = scalar_lea.sflag [#allocation6], %s636
        %s638 = sand.u32 %s186, 1
        %s639 = scalar_lea.vmem [#allocation5], %s638
        %p640 = pneg %p199
        %p641 = pneg %p196
        %s642 = sand.u32 %s36, 1
        %s643 = scalar_lea.sflag [#allocation6], %s642
        %s644 = sand.u32 %s212, 1
        %s645 = scalar_lea.vmem [#allocation7], %s644
        %p646 = pneg %p225
        %p647 = pneg %p222
        %s648 = sand.u32 %s36, 1
        %s649 = scalar_lea.sflag [#allocation9], %s648
        %s650 = sand.u32 %s238, 1
        %s651 = smul.addr %s650, 16
        %s652 = scalar_lea.vmem [#allocation8], %s651
        %p653 = pneg %p251
        %p654 = pneg %p248
        %s655 = sand.u32 %s36, 1
        %s656 = scalar_lea.sflag [#allocation9], %s655
        %s657 = sand.u32 %s264, 1
        %s658 = scalar_lea.vmem [#allocation10], %s657
        %p659 = pneg %p277
        %p660 = pneg %p274
        %p661 = scmp.lt.s32.totalorder %s41, 1
        %s662 = scalar_select %p661, %s41, 1
        %s663 = smul.addr %s662, 8
        %s664 = smul.addr %s663, 4
        %s665 = scalar_lea.vmem %s9, %s664
        %p666 = pneg %p303
        %p667 = pneg %p300
        %p668 = scmp.lt.s32.totalorder %s41, 1
        %s669 = scalar_select %p668, %s41, 1
        %s670 = scalar_lea.vmem %s10, %s669
        %p671 = pneg %p329
        %p672 = pneg %p326
        %p673 = pneg %p350
        %p674 = pneg %p347
        %p675 = pneg %p371
        %p676 = pneg %p368
        %p677 = pneg %p397
        %p678 = pneg %p394
        %s679 = sand.u32 %s384, 1
        %s680 = scalar_lea.sflag [#allocation4], %s679
        %s681 = sand.u32 %s384, 1
        %s682 = smul.addr %s681, 16
        %s683 = scalar_lea.vmem [#allocation11], %s682
        %s684 = smul.u32 2, %s40
        %p685 = scmp.lt.s32.totalorder %s684, 3
        %s686 = scalar_select %p685, %s684, 3
        %s687 = smul.addr %s686, 8
        %s688 = scalar_lea.vmem %s0, %s687
        %s689 = smul.u32 2, %s40
        %p690 = scmp.lt.s32.totalorder %s41, 1
        %s691 = scalar_select %p690, %s41, 1
        %s692 = scalar_lea.vmem %s1, %s691
        %p693 = scmp.lt.s32.totalorder %s41, 1
        %s694 = scalar_select %p693, %s41, 1
        %s695 = smul.addr %s694, 4
        %s696 = smul.addr %s695, 4
        %s697 = scalar_lea.vmem %s3, %s696
        %p698 = scmp.lt.s32.totalorder %s41, 1
        %s699 = scalar_select %p698, %s41, 1
        %s700 = smul.addr %s699, 4
        %s701 = smul.addr %s700, 4
        %s702 = scalar_lea.vmem %s4, %s701
        %p703 = scmp.lt.s32.totalorder %s41, 1
        %s704 = scalar_select %p703, %s41, 1
        %s705 = smul.addr %s704, 8
        %s706 = smul.addr %s705, 4
        %s707 = scalar_lea.vmem %s9, %s706
        %p708 = scmp.lt.s32.totalorder %s41, 1
        %s709 = scalar_select %p708, %s41, 1
        %s710 = scalar_lea.vmem %s10, %s709
        %s711 = smul.u32 2, %s40
        %p713 = scmp.eq.s32.totalorder %s41, 0
        // Predicated region
        $region93: #{tpu_custom_call.1} parent=71 // pred_check
          %p714 = pneg %p713
        $region94: #{tpu_custom_call.1} parent=71 // pred_check_branch
          %716 = sbr.rel (%p714) target = $region96
        $region95: #{tpu_custom_call.1} parent=71 // pred_region
          %v717 = vld [vmem:[%s688] sm:$0xff]
          %v718 = vld [vmem:[%s688 + $0x8] sm:$0xff]
          %vm719 = vcmask 261120
          %720 = vst.msk [vmem:[%s683] sm:$0xff] %vm719, %v717
          %721 = vst.msk [vmem:[%s683 + $0x8] sm:$0xff] %vm719, %v718
        $region96: #{tpu_custom_call.1} parent=71 // pred_fallthru
          _
        %v722 = vld [vmem:[%s683] sm:$0xff]
        %v723 = vld [vmem:[%s683 + $0x8] sm:$0xff]
        %v724 = vld [vmem:[%s692] sm:$0x1]
        %v725 = vld [vmem:[%s566] sm:$0x1]
        %vm726 = vcmask 261120
        %v727 = vsel %vm726, %v722, 0.0
        %728 = vadd.xlane.f32.xlu0 %v727
        %v729 = vpop.xlane.xlu0 %728
        %v730 = vsel %vm726, %v723, 0.0
        %731 = vadd.xlane.f32.xlu0 %v730
        %v732 = vpop.xlane.xlu0 %731
        %v733 = vrcp.pop 32.0
        %v734 = vmul.f32 %v729, %v733
        %v735 = vmul.f32 %v732, %v733
        %v736 = vsub.f32 %v722, %v734
        %v737 = vsub.f32 %v723, %v735
        %v738 = vmul.f32 %v736, %v736
        %v739 = vmul.f32 %v737, %v737
        %v740 = vsel %vm726, %v738, 0.0
        %741 = vadd.xlane.f32.xlu0 %v740
        %v742 = vpop.xlane.xlu0 %741
        %v743 = vsel %vm726, %v739, 0.0
        %744 = vadd.xlane.f32.xlu0 %v743
        %v745 = vpop.xlane.xlu0 %744
        %v746 = vmul.f32 %v742, %v733
        %v747 = vmul.f32 %v745, %v733
        %v748 = vadd.f32 %v746, 1e-06
        %v749 = vadd.f32 %v747, 1e-06
        %v750 = vrsqrt.pop %v748
        %v751 = vrsqrt.pop %v749
        %v752 = vmul.f32 %v736, %v750
        %v753 = vmul.f32 %v737, %v751
        %v755 = vlaneseq
        %v756 = vshrl.u32 %v755, 7
        %v757 = vsub.s32 0, %v756
        %v758 = vrot.slane %v724, %v757
        %v760 = vmul.f32 %v752, %v758
        %v761 = vmul.f32 %v753, %v758
        %v763 = vlaneseq
        %v764 = vshrl.u32 %v763, 7
        %v765 = vsub.s32 0, %v764
        %v766 = vrot.slane %v725, %v765
        %v768 = vadd.f32 %v760, %v766
        %v769 = vadd.f32 %v761, %v766
        %v770 = vpack.c.bf16 %v769, %v768
        %v771 = vld [vmem:[%s697] sm:$0xf]
        %v772 = vld [vmem:[%s697 + $0x4] sm:$0xf]
        %v773 = vld [vmem:[%s697 + $0x8] sm:$0xf]
        %v774 = vld [vmem:[%s697 + $0xc] sm:$0xf]
        %v779 = vunpack.c.l.b16 %v771
        %v780 = vunpack.c.l.b16 %v772
        %v781 = vunpack.c.l.b16 %v773
        %v782 = vunpack.c.l.b16 %v774
        %v783 = vpack.c.b16 %v780, %v779
        %v784 = vpack.c.b16 %v782, %v781
        %v788 = vsel %vm726, %v770, 0
        %790 = vmatprep.subr.bf16.mxu0 0
        %791 = vmatpush1.bf16.msra.mxu0 %v783
        %792 = vmatprep.subr.bf16.mxu0 0
        %793 = vmatpush1.bf16.msra.mxu0 %v784
        %794 = vmatprep.subr.bf16.mxu0 0
        %795 = vmatpush1.bf16.msra.mxu0 0
        %796 = vmatprep.subr.bf16.mxu0 0
        %797 = vmatpush1.bf16.msra.mxu0 0
        %798 = vmatprep.subr.bf16.mxu0 0
        %799 = vmatpush1.bf16.msra.mxu0 0
        %800 = vmatprep.subr.bf16.mxu0 0
        %801 = vmatpush1.bf16.msra.mxu0 0
        %802 = vmatprep.subr.bf16.mxu0 0
        %803 = vmatpush1.bf16.msra.mxu0 0
        %804 = vmatprep.subr.bf16.mxu0 0
        %805 = vmatpush1.bf16.msra.mxu0 0
        %806 = vmatprep.subr.bf16.mxu0 0
        %807 = vmatpush1.bf16.msra.mxu0 0
        %808 = vmatprep.subr.bf16.mxu0 0
        %809 = vmatpush1.bf16.msra.mxu0 0
        %810 = vmatprep.subr.bf16.mxu0 0
        %811 = vmatpush1.bf16.msra.mxu0 0
        %812 = vmatprep.subr.bf16.mxu0 0
        %813 = vmatpush1.bf16.msra.mxu0 0
        %814 = vmatprep.subr.bf16.mxu0 0
        %815 = vmatpush1.bf16.msra.mxu0 0
        %816 = vmatprep.subr.bf16.mxu0 0
        %817 = vmatpush1.bf16.msra.mxu0 0
        %818 = vmatprep.subr.bf16.mxu0 0
        %819 = vmatpush1.bf16.msra.mxu0 0
        %820 = vmatprep.subr.bf16.mxu0 0
        %821 = vmatpush1.bf16.msra.mxu0 0
        %822 = vmatprep.mubr.bf16.mxu0 0
        %823 = vmatmul.mubr.bf16.gmra.mrb[0].mxu0 %v788
        %v824 = vpop.f32.mrb[0].mxu0
        %v825 = vadd.f32 0.0, %v824
        %v826 = vpop.f32.mrb[0].mxu0
        %v827 = vpop.f32.mrb[0].mxu0
        %v828 = vadd.f32 0.0, %v827
        %v829 = vpop.f32.mrb[0].mxu0
        %830 = vdwg.mxu0
        %v831 = vpack.c.bf16 %v825, %v825
        %v832 = vpack.c.bf16 %v828, %v828
        %834 = vrot.lane.b32.xlu0 %v831, 96
        %v835 = vpop.permute.xlu0 %834
        %vm836 = vcmask 64512
        %v838 = vsel %vm836, %v831, 0
        %v841 = vsel %vm836, %v835, 0
        %843 = vmatprep.subr.bf16.mxu0 0
        %844 = vmatpush1.bf16.xpose.msra.mxu0 %v841
        %845 = vmatprep.subr.bf16.mxu0 0
        %846 = vmatpush1.bf16.xpose.msra.mxu0 0
        %847 = vmatprep.subr.bf16.mxu0 0
        %848 = vmatpush1.bf16.xpose.msra.mxu0 0
        %849 = vmatprep.subr.bf16.mxu0 0
        %850 = vmatpush1.bf16.xpose.msra.mxu0 0
        %851 = vmatprep.subr.bf16.mxu0 0
        %852 = vmatpush1.bf16.xpose.msra.mxu0 0
        %853 = vmatprep.subr.bf16.mxu0 0
        %854 = vmatpush1.bf16.xpose.msra.mxu0 0
        %855 = vmatprep.subr.bf16.mxu0 0
        %856 = vmatpush1.bf16.xpose.msra.mxu0 0
        %857 = vmatprep.subr.bf16.mxu0 0
        %858 = vmatpush1.bf16.xpose.msra.mxu0 0
        %859 = vmatprep.subr.bf16.mxu0 0
        %860 = vmatpush1.bf16.xpose.msra.mxu0 0
        %861 = vmatprep.subr.bf16.mxu0 0
        %862 = vmatpush1.bf16.xpose.msra.mxu0 0
        %863 = vmatprep.subr.bf16.mxu0 0
        %864 = vmatpush1.bf16.xpose.msra.mxu0 0
        %865 = vmatprep.subr.bf16.mxu0 0
        %866 = vmatpush1.bf16.xpose.msra.mxu0 0
        %867 = vmatprep.subr.bf16.mxu0 0
        %868 = vmatpush1.bf16.xpose.msra.mxu0 0
        %869 = vmatprep.subr.bf16.mxu0 0
        %870 = vmatpush1.bf16.xpose.msra.mxu0 0
        %871 = vmatprep.subr.bf16.mxu0 0
        %872 = vmatpush1.bf16.xpose.msra.mxu0 0
        %873 = vmatprep.subr.bf16.mxu0 0
        %874 = vmatpush1.bf16.xpose.msra.mxu0 0
        %875 = vmatprep.mubr.bf16.mxu0 0
        %876 = vmatmul.mubr.bf16.gmra.mrb[0].mxu0 %v838
        %v877 = vpop.f32.mrb[0].mxu0
        %v878 = vadd.f32 0.0, %v877
        %v879 = vpop.f32.mrb[0].mxu0
        %v880 = vpop.f32.mrb[0].mxu0
        %v881 = vpop.f32.mrb[0].mxu0
        %882 = vdwg.mxu0
        %884 = vrot.lane.b32.xlu0 %v832, 96
        %v885 = vpop.permute.xlu0 %884
        %v887 = vsel %vm836, %v832, 0
        %v890 = vsel %vm836, %v885, 0
        %892 = vmatprep.subr.bf16.mxu0 0
        %893 = vmatpush1.bf16.xpose.msra.mxu0 %v890
        %894 = vmatprep.subr.bf16.mxu0 0
        %895 = vmatpush1.bf16.xpose.msra.mxu0 0
        %896 = vmatprep.subr.bf16.mxu0 0
        %897 = vmatpush1.bf16.xpose.msra.mxu0 0
        %898 = vmatprep.subr.bf16.mxu0 0
        %899 = vmatpush1.bf16.xpose.msra.mxu0 0
        %900 = vmatprep.subr.bf16.mxu0 0
        %901 = vmatpush1.bf16.xpose.msra.mxu0 0
        %902 = vmatprep.subr.bf16.mxu0 0
        %903 = vmatpush1.bf16.xpose.msra.mxu0 0
        %904 = vmatprep.subr.bf16.mxu0 0
        %905 = vmatpush1.bf16.xpose.msra.mxu0 0
        %906 = vmatprep.subr.bf16.mxu0 0
        %907 = vmatpush1.bf16.xpose.msra.mxu0 0
        %908 = vmatprep.subr.bf16.mxu0 0
        %909 = vmatpush1.bf16.xpose.msra.mxu0 0
        %910 = vmatprep.subr.bf16.mxu0 0
        %911 = vmatpush1.bf16.xpose.msra.mxu0 0
        %912 = vmatprep.subr.bf16.mxu0 0
        %913 = vmatpush1.bf16.xpose.msra.mxu0 0
        %914 = vmatprep.subr.bf16.mxu0 0
        %915 = vmatpush1.bf16.xpose.msra.mxu0 0
        %916 = vmatprep.subr.bf16.mxu0 0
        %917 = vmatpush1.bf16.xpose.msra.mxu0 0
        %918 = vmatprep.subr.bf16.mxu0 0
        %919 = vmatpush1.bf16.xpose.msra.mxu0 0
        %920 = vmatprep.subr.bf16.mxu0 0
        %921 = vmatpush1.bf16.xpose.msra.mxu0 0
        %922 = vmatprep.subr.bf16.mxu0 0
        %923 = vmatpush1.bf16.xpose.msra.mxu0 0
        %924 = vmatprep.mubr.bf16.mxu0 0
        %925 = vmatmul.mubr.bf16.gmra.mrb[0].mxu0 %v887
        %v926 = vpop.f32.mrb[0].mxu0
        %v927 = vadd.f32 0.0, %v926
        %v928 = vpop.f32.mrb[0].mxu0
        %v929 = vpop.f32.mrb[0].mxu0
        %v930 = vpop.f32.mrb[0].mxu0
        %931 = vdwg.mxu0
        %v932 = vsel %vm836, %v878, -inf
        %933 = vmax.xlane.f32.xlu0 %v932
        %v934 = vpop.xlane.xlu0 %933
        %v935 = vsel %vm836, %v927, -inf
        %936 = vmax.xlane.f32.xlu0 %v935
        %v937 = vpop.xlane.xlu0 %936
        %v938 = vsub.f32 %v878, %v934
        %v939 = vsub.f32 %v927, %v937
        %v940 = vmul.f32 %v938, 1.442695
        %v941 = vpow.pop %v940
        %v942 = vmul.f32 %v939, 1.442695
        %v943 = vpow.pop %v942
        %v944 = vsel %vm836, %v941, 0.0
        %945 = vadd.xlane.f32.xlu0 %v944
        %v946 = vpop.xlane.xlu0 %945
        %v947 = vsel %vm836, %v943, 0.0
        %948 = vadd.xlane.f32.xlu0 %v947
        %v949 = vpop.xlane.xlu0 %948
        %v950 = vpack.c.bf16 %v941, %v941
        %v951 = vpack.c.bf16 %v943, %v943
        %952 = vrot.lane.b32.xlu0 %v831, 64
        %v953 = vpop.permute.xlu0 %952
        %v955 = vsel %vm836, %v950, 0
        %vm957 = vcmask 1043456
        %v959 = vsel %vm957, %v953, 0
        %961 = vmatprep.subr.bf16.mxu0 0
        %962 = vmatpush1.bf16.msra.mxu0 %v959
        %963 = vmatprep.subr.bf16.mxu0 0
        %964 = vmatpush1.bf16.msra.mxu0 0
        %965 = vmatprep.subr.bf16.mxu0 0
        %966 = vmatpush1.bf16.msra.mxu0 0
        %967 = vmatprep.subr.bf16.mxu0 0
        %968 = vmatpush1.bf16.msra.mxu0 0
        %969 = vmatprep.subr.bf16.mxu0 0
        %970 = vmatpush1.bf16.msra.mxu0 0
        %971 = vmatprep.subr.bf16.mxu0 0
        %972 = vmatpush1.bf16.msra.mxu0 0
        %973 = vmatprep.subr.bf16.mxu0 0
        %974 = vmatpush1.bf16.msra.mxu0 0
        %975 = vmatprep.subr.bf16.mxu0 0
        %976 = vmatpush1.bf16.msra.mxu0 0
        %977 = vmatprep.subr.bf16.mxu0 0
        %978 = vmatpush1.bf16.msra.mxu0 0
        %979 = vmatprep.subr.bf16.mxu0 0
        %980 = vmatpush1.bf16.msra.mxu0 0
        %981 = vmatprep.subr.bf16.mxu0 0
        %982 = vmatpush1.bf16.msra.mxu0 0
        %983 = vmatprep.subr.bf16.mxu0 0
        %984 = vmatpush1.bf16.msra.mxu0 0
        %985 = vmatprep.subr.bf16.mxu0 0
        %986 = vmatpush1.bf16.msra.mxu0 0
        %987 = vmatprep.subr.bf16.mxu0 0
        %988 = vmatpush1.bf16.msra.mxu0 0
        %989 = vmatprep.subr.bf16.mxu0 0
        %990 = vmatpush1.bf16.msra.mxu0 0
        %991 = vmatprep.subr.bf16.mxu0 0
        %992 = vmatpush1.bf16.msra.mxu0 0
        %993 = vmatprep.mubr.bf16.mxu0 0
        %994 = vmatmul.mubr.bf16.gmra.mrb[0].mxu0 %v955
        %v995 = vpop.f32.mrb[0].mxu0
        %v996 = vadd.f32 0.0, %v995
        %v997 = vpop.f32.mrb[0].mxu0
        %v998 = vpop.f32.mrb[0].mxu0
        %v999 = vpop.f32.mrb[0].mxu0
        %1000 = vdwg.mxu0
        %1001 = vrot.lane.b32.xlu0 %v832, 64
        %v1002 = vpop.permute.xlu0 %1001
        %v1004 = vsel %vm836, %v951, 0
        %v1007 = vsel %vm957, %v1002, 0
        %1009 = vmatprep.subr.bf16.mxu0 0
        %1010 = vmatpush1.bf16.msra.mxu0 %v1007
        %1011 = vmatprep.subr.bf16.mxu0 0
        %1012 = vmatpush1.bf16.msra.mxu0 0
        %1013 = vmatprep.subr.bf16.mxu0 0
        %1014 = vmatpush1.bf16.msra.mxu0 0
        %1015 = vmatprep.subr.bf16.mxu0 0
        %1016 = vmatpush1.bf16.msra.mxu0 0
        %1017 = vmatprep.subr.bf16.mxu0 0
        %1018 = vmatpush1.bf16.msra.mxu0 0
        %1019 = vmatprep.subr.bf16.mxu0 0
        %1020 = vmatpush1.bf16.msra.mxu0 0
        %1021 = vmatprep.subr.bf16.mxu0 0
        %1022 = vmatpush1.bf16.msra.mxu0 0
        %1023 = vmatprep.subr.bf16.mxu0 0
        %1024 = vmatpush1.bf16.msra.mxu0 0
        %1025 = vmatprep.subr.bf16.mxu0 0
        %1026 = vmatpush1.bf16.msra.mxu0 0
        %1027 = vmatprep.subr.bf16.mxu0 0
        %1028 = vmatpush1.bf16.msra.mxu0 0
        %1029 = vmatprep.subr.bf16.mxu0 0
        %1030 = vmatpush1.bf16.msra.mxu0 0
        %1031 = vmatprep.subr.bf16.mxu0 0
        %1032 = vmatpush1.bf16.msra.mxu0 0
        %1033 = vmatprep.subr.bf16.mxu0 0
        %1034 = vmatpush1.bf16.msra.mxu0 0
        %1035 = vmatprep.subr.bf16.mxu0 0
        %1036 = vmatpush1.bf16.msra.mxu0 0
        %1037 = vmatprep.subr.bf16.mxu0 0
        %1038 = vmatpush1.bf16.msra.mxu0 0
        %1039 = vmatprep.subr.bf16.mxu0 0
        %1040 = vmatpush1.bf16.msra.mxu0 0
        %1041 = vmatprep.mubr.bf16.mxu0 0
        %1042 = vmatmul.mubr.bf16.gmra.mrb[0].mxu0 %v1004
        %v1043 = vpop.f32.mrb[0].mxu0
        %v1044 = vadd.f32 0.0, %v1043
        %v1045 = vpop.f32.mrb[0].mxu0
        %v1046 = vpop.f32.mrb[0].mxu0
        %v1047 = vpop.f32.mrb[0].mxu0
        %1048 = vdwg.mxu0
        %v1049 = vrcp.pop %v946
        %v1050 = vrcp.pop %v949
        %v1051 = vmul.f32 %v996, %v1049
        %v1052 = vmul.f32 %v1044, %v1050
        %1053 = vrot.lane.b32.xlu0 %v831, 120
        %v1054 = vpop.permute.xlu0 %1053
        %1055 = vrot.lane.b32.xlu0 %v831, 88
        %v1056 = vpop.permute.xlu0 %1055
        %v1058 = vsel %vm836, %v1054, 0
        %v1061 = vsel %vm836, %v1056, 0
        %1063 = vmatprep.subr.bf16.mxu0 0
        %1064 = vmatpush1.bf16.xpose.msra.mxu0 %v1061
        %1065 = vmatprep.subr.bf16.mxu0 0
        %1066 = vmatpush1.bf16.xpose.msra.mxu0 0
        %1067 = vmatprep.subr.bf16.mxu0 0
        %1068 = vmatpush1.bf16.xpose.msra.mxu0 0
        %1069 = vmatprep.subr.bf16.mxu0 0
        %1070 = vmatpush1.bf16.xpose.msra.mxu0 0
        %1071 = vmatprep.subr.bf16.mxu0 0
        %1072 = vmatpush1.bf16.xpose.msra.mxu0 0
        %1073 = vmatprep.subr.bf16.mxu0 0
        %1074 = vmatpush1.bf16.xpose.msra.mxu0 0
        %1075 = vmatprep.subr.bf16.mxu0 0
        %1076 = vmatpush1.bf16.xpose.msra.mxu0 0
        %1077 = vmatprep.subr.bf16.mxu0 0
        %1078 = vmatpush1.bf16.xpose.msra.mxu0 0
        %1079 = vmatprep.subr.bf16.mxu0 0
        %1080 = vmatpush1.bf16.xpose.msra.mxu0 0
        %1081 = vmatprep.subr.bf16.mxu0 0
        %1082 = vmatpush1.bf16.xpose.msra.mxu0 0
        %1083 = vmatprep.subr.bf16.mxu0 0
        %1084 = vmatpush1.bf16.xpose.msra.mxu0 0
        %1085 = vmatprep.subr.bf16.mxu0 0
        %1086 = vmatpush1.bf16.xpose.msra.mxu0 0
        %1087 = vmatprep.subr.bf16.mxu0 0
        %1088 = vmatpush1.bf16.xpose.msra.mxu0 0
        %1089 = vmatprep.subr.bf16.mxu0 0
        %1090 = vmatpush1.bf16.xpose.msra.mxu0 0
        %1091 = vmatprep.subr.bf16.mxu0 0
        %1092 = vmatpush1.bf16.xpose.msra.mxu0 0
        %1093 = vmatprep.subr.bf16.mxu0 0
        %1094 = vmatpush1.bf16.xpose.msra.mxu0 0
        %1095 = vmatprep.mubr.bf16.mxu0 0
        %1096 = vmatmul.mubr.bf16.gmra.mrb[0].mxu0 %v1058
        %v1097 = vpop.f32.mrb[0].mxu0
        %v1098 = vadd.f32 0.0, %v1097
        %v1099 = vpop.f32.mrb[0].mxu0
        %v1100 = vpop.f32.mrb[0].mxu0
        %v1101 = vpop.f32.mrb[0].mxu0
        %1102 = vdwg.mxu0
        %1103 = vrot.lane.b32.xlu0 %v832, 120
        %v1104 = vpop.permute.xlu0 %1103
        %1105 = vrot.lane.b32.xlu0 %v832, 88
        %v1106 = vpop.permute.xlu0 %1105
        %v1108 = vsel %vm836, %v1104, 0
        %v1111 = vsel %vm836, %v1106, 0
        %1113 = vmatprep.subr.bf16.mxu0 0
        %1114 = vmatpush1.bf16.xpose.msra.mxu0 %v1111
        %1115 = vmatprep.subr.bf16.mxu0 0
        %1116 = vmatpush1.bf16.xpose.msra.mxu0 0
        %1117 = vmatprep.subr.bf16.mxu0 0
        %1118 = vmatpush1.bf16.xpose.msra.mxu0 0
        %1119 = vmatprep.subr.bf16.mxu0 0
        %1120 = vmatpush1.bf16.xpose.msra.mxu0 0
        %1121 = vmatprep.subr.bf16.mxu0 0
        %1122 = vmatpush1.bf16.xpose.msra.mxu0 0
        %1123 = vmatprep.subr.bf16.mxu0 0
        %1124 = vmatpush1.bf16.xpose.msra.mxu0 0
        %1125 = vmatprep.subr.bf16.mxu0 0
        %1126 = vmatpush1.bf16.xpose.msra.mxu0 0
        %1127 = vmatprep.subr.bf16.mxu0 0
        %1128 = vmatpush1.bf16.xpose.msra.mxu0 0
        %1129 = vmatprep.subr.bf16.mxu0 0
        %1130 = vmatpush1.bf16.xpose.msra.mxu0 0
        %1131 = vmatprep.subr.bf16.mxu0 0
        %1132 = vmatpush1.bf16.xpose.msra.mxu0 0
        %1133 = vmatprep.subr.bf16.mxu0 0
        %1134 = vmatpush1.bf16.xpose.msra.mxu0 0
        %1135 = vmatprep.subr.bf16.mxu0 0
        %1136 = vmatpush1.bf16.xpose.msra.mxu0 0
        %1137 = vmatprep.subr.bf16.mxu0 0
        %1138 = vmatpush1.bf16.xpose.msra.mxu0 0
        %1139 = vmatprep.subr.bf16.mxu0 0
        %1140 = vmatpush1.bf16.xpose.msra.mxu0 0
        %1141 = vmatprep.subr.bf16.mxu0 0
        %1142 = vmatpush1.bf16.xpose.msra.mxu0 0
        %1143 = vmatprep.subr.bf16.mxu0 0
        %1144 = vmatpush1.bf16.xpose.msra.mxu0 0
        %1145 = vmatprep.mubr.bf16.mxu0 0
        %1146 = vmatmul.mubr.bf16.gmra.mrb[0].mxu0 %v1108
        %v1147 = vpop.f32.mrb[0].mxu0
        %v1148 = vadd.f32 0.0, %v1147
        %v1149 = vpop.f32.mrb[0].mxu0
        %v1150 = vpop.f32.mrb[0].mxu0
        %v1151 = vpop.f32.mrb[0].mxu0
        %1152 = vdwg.mxu0
        %v1153 = vsel %vm836, %v1098, -inf
        %1154 = vmax.xlane.f32.xlu0 %v1153
        %v1155 = vpop.xlane.xlu0 %1154
        %v1156 = vsel %vm836, %v1148, -inf
        %1157 = vmax.xlane.f32.xlu0 %v1156
        %v1158 = vpop.xlane.xlu0 %1157
        %v1159 = vsub.f32 %v1098, %v1155
        %v1160 = vsub.f32 %v1148, %v1158
        %v1161 = vmul.f32 %v1159, 1.442695
        %v1162 = vpow.pop %v1161
        %v1163 = vmul.f32 %v1160, 1.442695
        %v1164 = vpow.pop %v1163
        %v1165 = vsel %vm836, %v1162, 0.0
        %1166 = vadd.xlane.f32.xlu0 %v1165
        %v1167 = vpop.xlane.xlu0 %1166
        %v1168 = vsel %vm836, %v1164, 0.0
        %1169 = vadd.xlane.f32.xlu0 %v1168
        %v1170 = vpop.xlane.xlu0 %1169
        %v1171 = vpack.c.bf16 %v1162, %v1162
        %v1172 = vpack.c.bf16 %v1164, %v1164
        %1173 = vrot.lane.b32.xlu0 %v831, 56
        %v1174 = vpop.permute.xlu0 %1173
        %v1176 = vsel %vm836, %v1171, 0
        %v1179 = vsel %vm957, %v1174, 0
        %1181 = vmatprep.subr.bf16.mxu0 0
        %1182 = vmatpush1.bf16.msra.mxu0 %v1179
        %1183 = vmatprep.subr.bf16.mxu0 0
        %1184 = vmatpush1.bf16.msra.mxu0 0
        %1185 = vmatprep.subr.bf16.mxu0 0
        %1186 = vmatpush1.bf16.msra.mxu0 0
        %1187 = vmatprep.subr.bf16.mxu0 0
        %1188 = vmatpush1.bf16.msra.mxu0 0
        %1189 = vmatprep.subr.bf16.mxu0 0
        %1190 = vmatpush1.bf16.msra.mxu0 0
        %1191 = vmatprep.subr.bf16.mxu0 0
        %1192 = vmatpush1.bf16.msra.mxu0 0
        %1193 = vmatprep.subr.bf16.mxu0 0
        %1194 = vmatpush1.bf16.msra.mxu0 0
        %1195 = vmatprep.subr.bf16.mxu0 0
        %1196 = vmatpush1.bf16.msra.mxu0 0
        %1197 = vmatprep.subr.bf16.mxu0 0
        %1198 = vmatpush1.bf16.msra.mxu0 0
        %1199 = vmatprep.subr.bf16.mxu0 0
        %1200 = vmatpush1.bf16.msra.mxu0 0
        %1201 = vmatprep.subr.bf16.mxu0 0
        %1202 = vmatpush1.bf16.msra.mxu0 0
        %1203 = vmatprep.subr.bf16.mxu0 0
        %1204 = vmatpush1.bf16.msra.mxu0 0
        %1205 = vmatprep.subr.bf16.mxu0 0
        %1206 = vmatpush1.bf16.msra.mxu0 0
        %1207 = vmatprep.subr.bf16.mxu0 0
        %1208 = vmatpush1.bf16.msra.mxu0 0
        %1209 = vmatprep.subr.bf16.mxu0 0
        %1210 = vmatpush1.bf16.msra.mxu0 0
        %1211 = vmatprep.subr.bf16.mxu0 0
        %1212 = vmatpush1.bf16.msra.mxu0 0
        %1213 = vmatprep.mubr.bf16.mxu0 0
        %1214 = vmatmul.mubr.bf16.gmra.mrb[0].mxu0 %v1176
        %v1215 = vpop.f32.mrb[0].mxu0
        %v1216 = vadd.f32 0.0, %v1215
        %v1217 = vpop.f32.mrb[0].mxu0
        %v1218 = vpop.f32.mrb[0].mxu0
        %v1219 = vpop.f32.mrb[0].mxu0
        %1220 = vdwg.mxu0
        %1221 = vrot.lane.b32.xlu0 %v832, 56
        %v1222 = vpop.permute.xlu0 %1221
        %v1224 = vsel %vm836, %v1172, 0
        %v1227 = vsel %vm957, %v1222, 0
        %1229 = vmatprep.subr.bf16.mxu0 0
        %1230 = vmatpush1.bf16.msra.mxu0 %v1227
        %1231 = vmatprep.subr.bf16.mxu0 0
        %1232 = vmatpush1.bf16.msra.mxu0 0
        %1233 = vmatprep.subr.bf16.mxu0 0
        %1234 = vmatpush1.bf16.msra.mxu0 0
        %1235 = vmatprep.subr.bf16.mxu0 0
        %1236 = vmatpush1.bf16.msra.mxu0 0
        %1237 = vmatprep.subr.bf16.mxu0 0
        %1238 = vmatpush1.bf16.msra.mxu0 0
        %1239 = vmatprep.subr.bf16.mxu0 0
        %1240 = vmatpush1.bf16.msra.mxu0 0
        %1241 = vmatprep.subr.bf16.mxu0 0
        %1242 = vmatpush1.bf16.msra.mxu0 0
        %1243 = vmatprep.subr.bf16.mxu0 0
        %1244 = vmatpush1.bf16.msra.mxu0 0
        %1245 = vmatprep.subr.bf16.mxu0 0
        %1246 = vmatpush1.bf16.msra.mxu0 0
        %1247 = vmatprep.subr.bf16.mxu0 0
        %1248 = vmatpush1.bf16.msra.mxu0 0
        %1249 = vmatprep.subr.bf16.mxu0 0
        %1250 = vmatpush1.bf16.msra.mxu0 0
        %1251 = vmatprep.subr.bf16.mxu0 0
        %1252 = vmatpush1.bf16.msra.mxu0 0
        %1253 = vmatprep.subr.bf16.mxu0 0
        %1254 = vmatpush1.bf16.msra.mxu0 0
        %1255 = vmatprep.subr.bf16.mxu0 0
        %1256 = vmatpush1.bf16.msra.mxu0 0
        %1257 = vmatprep.subr.bf16.mxu0 0
        %1258 = vmatpush1.bf16.msra.mxu0 0
        %1259 = vmatprep.subr.bf16.mxu0 0
        %1260 = vmatpush1.bf16.msra.mxu0 0
        %1261 = vmatprep.mubr.bf16.mxu0 0
        %1262 = vmatmul.mubr.bf16.gmra.mrb[0].mxu0 %v1224
        %v1263 = vpop.f32.mrb[0].mxu0
        %v1264 = vadd.f32 0.0, %v1263
        %v1265 = vpop.f32.mrb[0].mxu0
        %v1266 = vpop.f32.mrb[0].mxu0
        %v1267 = vpop.f32.mrb[0].mxu0
        %1268 = vdwg.mxu0
        %v1269 = vrcp.pop %v1167
        %v1270 = vrcp.pop %v1170
        %v1271 = vmul.f32 %v1216, %v1269
        %v1272 = vmul.f32 %v1264, %v1270
        %1273 = vrot.lane.b32.xlu0 %v831, 112
        %v1274 = vpop.permute.xlu0 %1273
        %1275 = vrot.lane.b32.xlu0 %v831, 80
        %v1276 = vpop.permute.xlu0 %1275
        %v1278 = vsel %vm836, %v1274, 0
        %v1281 = vsel %vm836, %v1276, 0
        %1283 = vmatprep.subr.bf16.mxu0 0
        %1284 = vmatpush1.bf16.xpose.msra.mxu0 %v1281
        %1285 = vmatprep.subr.bf16.mxu0 0
        %1286 = vmatpush1.bf16.xpose.msra.mxu0 0
        %1287 = vmatprep.subr.bf16.mxu0 0
        %1288 = vmatpush1.bf16.xpose.msra.mxu0 0
        %1289 = vmatprep.subr.bf16.mxu0 0
        %1290 = vmatpush1.bf16.xpose.msra.mxu0 0
        %1291 = vmatprep.subr.bf16.mxu0 0
        %1292 = vmatpush1.bf16.xpose.msra.mxu0 0
        %1293 = vmatprep.subr.bf16.mxu0 0
        %1294 = vmatpush1.bf16.xpose.msra.mxu0 0
        %1295 = vmatprep.subr.bf16.mxu0 0
        %1296 = vmatpush1.bf16.xpose.msra.mxu0 0
        %1297 = vmatprep.subr.bf16.mxu0 0
        %1298 = vmatpush1.bf16.xpose.msra.mxu0 0
        %1299 = vmatprep.subr.bf16.mxu0 0
        %1300 = vmatpush1.bf16.xpose.msra.mxu0 0
        %1301 = vmatprep.subr.bf16.mxu0 0
        %1302 = vmatpush1.bf16.xpose.msra.mxu0 0
        %1303 = vmatprep.subr.bf16.mxu0 0
        %1304 = vmatpush1.bf16.xpose.msra.mxu0 0
        %1305 = vmatprep.subr.bf16.mxu0 0
        %1306 = vmatpush1.bf16.xpose.msra.mxu0 0
        %1307 = vmatprep.subr.bf16.mxu0 0
        %1308 = vmatpush1.bf16.xpose.msra.mxu0 0
        %1309 = vmatprep.subr.bf16.mxu0 0
        %1310 = vmatpush1.bf16.xpose.msra.mxu0 0
        %1311 = vmatprep.subr.bf16.mxu0 0
        %1312 = vmatpush1.bf16.xpose.msra.mxu0 0
        %1313 = vmatprep.subr.bf16.mxu0 0
        %1314 = vmatpush1.bf16.xpose.msra.mxu0 0
        %1315 = vmatprep.mubr.bf16.mxu0 0
        %1316 = vmatmul.mubr.bf16.gmra.mrb[0].mxu0 %v1278
        %v1317 = vpop.f32.mrb[0].mxu0
        %v1318 = vadd.f32 0.0, %v1317
        %v1319 = vpop.f32.mrb[0].mxu0
        %v1320 = vpop.f32.mrb[0].mxu0
        %v1321 = vpop.f32.mrb[0].mxu0
        %1322 = vdwg.mxu0
        %1323 = vrot.lane.b32.xlu0 %v832, 112
        %v1324 = vpop.permute.xlu0 %1323
        %1325 = vrot.lane.b32.xlu0 %v832, 80
        %v1326 = vpop.permute.xlu0 %1325
        %v1328 = vsel %vm836, %v1324, 0
        %v1331 = vsel %vm836, %v1326, 0
        %1333 = vmatprep.subr.bf16.mxu0 0
        %1334 = vmatpush1.bf16.xpose.msra.mxu0 %v1331
        %1335 = vmatprep.subr.bf16.mxu0 0
        %1336 = vmatpush1.bf16.xpose.msra.mxu0 0
        %1337 = vmatprep.subr.bf16.mxu0 0
        %1338 = vmatpush1.bf16.xpose.msra.mxu0 0
        %1339 = vmatprep.subr.bf16.mxu0 0
        %1340 = vmatpush1.bf16.xpose.msra.mxu0 0
        %1341 = vmatprep.subr.bf16.mxu0 0
        %1342 = vmatpush1.bf16.xpose.msra.mxu0 0
        %1343 = vmatprep.subr.bf16.mxu0 0
        %1344 = vmatpush1.bf16.xpose.msra.mxu0 0
        %1345 = vmatprep.subr.bf16.mxu0 0
        %1346 = vmatpush1.bf16.xpose.msra.mxu0 0
        %1347 = vmatprep.subr.bf16.mxu0 0
        %1348 = vmatpush1.bf16.xpose.msra.mxu0 0
        %1349 = vmatprep.subr.bf16.mxu0 0
        %1350 = vmatpush1.bf16.xpose.msra.mxu0 0
        %1351 = vmatprep.subr.bf16.mxu0 0
        %1352 = vmatpush1.bf16.xpose.msra.mxu0 0
        %1353 = vmatprep.subr.bf16.mxu0 0
        %1354 = vmatpush1.bf16.xpose.msra.mxu0 0
        %1355 = vmatprep.subr.bf16.mxu0 0
        %1356 = vmatpush1.bf16.xpose.msra.mxu0 0
        %1357 = vmatprep.subr.bf16.mxu0 0
        %1358 = vmatpush1.bf16.xpose.msra.mxu0 0
        %1359 = vmatprep.subr.bf16.mxu0 0
        %1360 = vmatpush1.bf16.xpose.msra.mxu0 0
        %1361 = vmatprep.subr.bf16.mxu0 0
        %1362 = vmatpush1.bf16.xpose.msra.mxu0 0
        %1363 = vmatprep.subr.bf16.mxu0 0
        %1364 = vmatpush1.bf16.xpose.msra.mxu0 0
        %1365 = vmatprep.mubr.bf16.mxu0 0
        %1366 = vmatmul.mubr.bf16.gmra.mrb[0].mxu0 %v1328
        %v1367 = vpop.f32.mrb[0].mxu0
        %v1368 = vadd.f32 0.0, %v1367
        %v1369 = vpop.f32.mrb[0].mxu0
        %v1370 = vpop.f32.mrb[0].mxu0
        %v1371 = vpop.f32.mrb[0].mxu0
        %1372 = vdwg.mxu0
        %v1373 = vsel %vm836, %v1318, -inf
        %1374 = vmax.xlane.f32.xlu0 %v1373
        %v1375 = vpop.xlane.xlu0 %1374
        %v1376 = vsel %vm836, %v1368, -inf
        %1377 = vmax.xlane.f32.xlu0 %v1376
        %v1378 = vpop.xlane.xlu0 %1377
        %v1379 = vsub.f32 %v1318, %v1375
        %v1380 = vsub.f32 %v1368, %v1378
        %v1381 = vmul.f32 %v1379, 1.442695
        %v1382 = vpow.pop %v1381
        %v1383 = vmul.f32 %v1380, 1.442695
        %v1384 = vpow.pop %v1383
        %v1385 = vsel %vm836, %v1382, 0.0
        %1386 = vadd.xlane.f32.xlu0 %v1385
        %v1387 = vpop.xlane.xlu0 %1386
        %v1388 = vsel %vm836, %v1384, 0.0
        %1389 = vadd.xlane.f32.xlu0 %v1388
        %v1390 = vpop.xlane.xlu0 %1389
        %v1391 = vpack.c.bf16 %v1382, %v1382
        %v1392 = vpack.c.bf16 %v1384, %v1384
        %1393 = vrot.lane.b32.xlu0 %v831, 48
        %v1394 = vpop.permute.xlu0 %1393
        %v1396 = vsel %vm836, %v1391, 0
        %v1399 = vsel %vm957, %v1394, 0
        %1401 = vmatprep.subr.bf16.mxu0 0
        %1402 = vmatpush1.bf16.msra.mxu0 %v1399
        %1403 = vmatprep.subr.bf16.mxu0 0
        %1404 = vmatpush1.bf16.msra.mxu0 0
        %1405 = vmatprep.subr.bf16.mxu0 0
        %1406 = vmatpush1.bf16.msra.mxu0 0
        %1407 = vmatprep.subr.bf16.mxu0 0
        %1408 = vmatpush1.bf16.msra.mxu0 0
        %1409 = vmatprep.subr.bf16.mxu0 0
        %1410 = vmatpush1.bf16.msra.mxu0 0
        %1411 = vmatprep.subr.bf16.mxu0 0
        %1412 = vmatpush1.bf16.msra.mxu0 0
        %1413 = vmatprep.subr.bf16.mxu0 0
        %1414 = vmatpush1.bf16.msra.mxu0 0
        %1415 = vmatprep.subr.bf16.mxu0 0
        %1416 = vmatpush1.bf16.msra.mxu0 0
        %1417 = vmatprep.subr.bf16.mxu0 0
        %1418 = vmatpush1.bf16.msra.mxu0 0
        %1419 = vmatprep.subr.bf16.mxu0 0
        %1420 = vmatpush1.bf16.msra.mxu0 0
        %1421 = vmatprep.subr.bf16.mxu0 0
        %1422 = vmatpush1.bf16.msra.mxu0 0
        %1423 = vmatprep.subr.bf16.mxu0 0
        %1424 = vmatpush1.bf16.msra.mxu0 0
        %1425 = vmatprep.subr.bf16.mxu0 0
        %1426 = vmatpush1.bf16.msra.mxu0 0
        %1427 = vmatprep.subr.bf16.mxu0 0
        %1428 = vmatpush1.bf16.msra.mxu0 0
        %1429 = vmatprep.subr.bf16.mxu0 0
        %1430 = vmatpush1.bf16.msra.mxu0 0
        %1431 = vmatprep.subr.bf16.mxu0 0
        %1432 = vmatpush1.bf16.msra.mxu0 0
        %1433 = vmatprep.mubr.bf16.mxu0 0
        %1434 = vmatmul.mubr.bf16.gmra.mrb[0].mxu0 %v1396
        %v1435 = vpop.f32.mrb[0].mxu0
        %v1436 = vadd.f32 0.0, %v1435
        %v1437 = vpop.f32.mrb[0].mxu0
        %v1438 = vpop.f32.mrb[0].mxu0
        %v1439 = vpop.f32.mrb[0].mxu0
        %1440 = vdwg.mxu0
        %1441 = vrot.lane.b32.xlu0 %v832, 48
        %v1442 = vpop.permute.xlu0 %1441
        %v1444 = vsel %vm836, %v1392, 0
        %v1447 = vsel %vm957, %v1442, 0
        %1449 = vmatprep.subr.bf16.mxu0 0
        %1450 = vmatpush1.bf16.msra.mxu0 %v1447
        %1451 = vmatprep.subr.bf16.mxu0 0
        %1452 = vmatpush1.bf16.msra.mxu0 0
        %1453 = vmatprep.subr.bf16.mxu0 0
        %1454 = vmatpush1.bf16.msra.mxu0 0
        %1455 = vmatprep.subr.bf16.mxu0 0
        %1456 = vmatpush1.bf16.msra.mxu0 0
        %1457 = vmatprep.subr.bf16.mxu0 0
        %1458 = vmatpush1.bf16.msra.mxu0 0
        %1459 = vmatprep.subr.bf16.mxu0 0
        %1460 = vmatpush1.bf16.msra.mxu0 0
        %1461 = vmatprep.subr.bf16.mxu0 0
        %1462 = vmatpush1.bf16.msra.mxu0 0
        %1463 = vmatprep.subr.bf16.mxu0 0
        %1464 = vmatpush1.bf16.msra.mxu0 0
        %1465 = vmatprep.subr.bf16.mxu0 0
        %1466 = vmatpush1.bf16.msra.mxu0 0
        %1467 = vmatprep.subr.bf16.mxu0 0
        %1468 = vmatpush1.bf16.msra.mxu0 0
        %1469 = vmatprep.subr.bf16.mxu0 0
        %1470 = vmatpush1.bf16.msra.mxu0 0
        %1471 = vmatprep.subr.bf16.mxu0 0
        %1472 = vmatpush1.bf16.msra.mxu0 0
        %1473 = vmatprep.subr.bf16.mxu0 0
        %1474 = vmatpush1.bf16.msra.mxu0 0
        %1475 = vmatprep.subr.bf16.mxu0 0
        %1476 = vmatpush1.bf16.msra.mxu0 0
        %1477 = vmatprep.subr.bf16.mxu0 0
        %1478 = vmatpush1.bf16.msra.mxu0 0
        %1479 = vmatprep.subr.bf16.mxu0 0
        %1480 = vmatpush1.bf16.msra.mxu0 0
        %1481 = vmatprep.mubr.bf16.mxu0 0
        %1482 = vmatmul.mubr.bf16.gmra.mrb[0].mxu0 %v1444
        %v1483 = vpop.f32.mrb[0].mxu0
        %v1484 = vadd.f32 0.0, %v1483
        %v1485 = vpop.f32.mrb[0].mxu0
        %v1486 = vpop.f32.mrb[0].mxu0
        %v1487 = vpop.f32.mrb[0].mxu0
        %1488 = vdwg.mxu0
        %v1489 = vrcp.pop %v1387
        %v1490 = vrcp.pop %v1390
        %v1491 = vmul.f32 %v1436, %v1489
        %v1492 = vmul.f32 %v1484, %v1490
        %1493 = vrot.lane.b32.xlu0 %v831, 104
        %v1494 = vpop.permute.xlu0 %1493
        %1495 = vrot.lane.b32.xlu0 %v831, 72
        %v1496 = vpop.permute.xlu0 %1495
        %v1498 = vsel %vm836, %v1494, 0
        %v1501 = vsel %vm836, %v1496, 0
        %1503 = vmatprep.subr.bf16.mxu0 0
        %1504 = vmatpush1.bf16.xpose.msra.mxu0 %v1501
        %1505 = vmatprep.subr.bf16.mxu0 0
        %1506 = vmatpush1.bf16.xpose.msra.mxu0 0
        %1507 = vmatprep.subr.bf16.mxu0 0
        %1508 = vmatpush1.bf16.xpose.msra.mxu0 0
        %1509 = vmatprep.subr.bf16.mxu0 0
        %1510 = vmatpush1.bf16.xpose.msra.mxu0 0
        %1511 = vmatprep.subr.bf16.mxu0 0
        %1512 = vmatpush1.bf16.xpose.msra.mxu0 0
        %1513 = vmatprep.subr.bf16.mxu0 0
        %1514 = vmatpush1.bf16.xpose.msra.mxu0 0
        %1515 = vmatprep.subr.bf16.mxu0 0
        %1516 = vmatpush1.bf16.xpose.msra.mxu0 0
        %1517 = vmatprep.subr.bf16.mxu0 0
        %1518 = vmatpush1.bf16.xpose.msra.mxu0 0
        %1519 = vmatprep.subr.bf16.mxu0 0
        %1520 = vmatpush1.bf16.xpose.msra.mxu0 0
        %1521 = vmatprep.subr.bf16.mxu0 0
        %1522 = vmatpush1.bf16.xpose.msra.mxu0 0
        %1523 = vmatprep.subr.bf16.mxu0 0
        %1524 = vmatpush1.bf16.xpose.msra.mxu0 0
        %1525 = vmatprep.subr.bf16.mxu0 0
        %1526 = vmatpush1.bf16.xpose.msra.mxu0 0
        %1527 = vmatprep.subr.bf16.mxu0 0
        %1528 = vmatpush1.bf16.xpose.msra.mxu0 0
        %1529 = vmatprep.subr.bf16.mxu0 0
        %1530 = vmatpush1.bf16.xpose.msra.mxu0 0
        %1531 = vmatprep.subr.bf16.mxu0 0
        %1532 = vmatpush1.bf16.xpose.msra.mxu0 0
        %1533 = vmatprep.subr.bf16.mxu0 0
        %1534 = vmatpush1.bf16.xpose.msra.mxu0 0
        %1535 = vmatprep.mubr.bf16.mxu0 0
        %1536 = vmatmul.mubr.bf16.gmra.mrb[0].mxu0 %v1498
        %v1537 = vpop.f32.mrb[0].mxu0
        %v1538 = vadd.f32 0.0, %v1537
        %v1539 = vpop.f32.mrb[0].mxu0
        %v1540 = vpop.f32.mrb[0].mxu0
        %v1541 = vpop.f32.mrb[0].mxu0
        %1542 = vdwg.mxu0
        %1543 = vrot.lane.b32.xlu0 %v832, 104
        %v1544 = vpop.permute.xlu0 %1543
        %1545 = vrot.lane.b32.xlu0 %v832, 72
        %v1546 = vpop.permute.xlu0 %1545
        %v1548 = vsel %vm836, %v1544, 0
        %v1551 = vsel %vm836, %v1546, 0
        %1553 = vmatprep.subr.bf16.mxu0 0
        %1554 = vmatpush1.bf16.xpose.msra.mxu0 %v1551
        %1555 = vmatprep.subr.bf16.mxu0 0
        %1556 = vmatpush1.bf16.xpose.msra.mxu0 0
        %1557 = vmatprep.subr.bf16.mxu0 0
        %1558 = vmatpush1.bf16.xpose.msra.mxu0 0
        %1559 = vmatprep.subr.bf16.mxu0 0
        %1560 = vmatpush1.bf16.xpose.msra.mxu0 0
        %1561 = vmatprep.subr.bf16.mxu0 0
        %1562 = vmatpush1.bf16.xpose.msra.mxu0 0
        %1563 = vmatprep.subr.bf16.mxu0 0
        %1564 = vmatpush1.bf16.xpose.msra.mxu0 0
        %1565 = vmatprep.subr.bf16.mxu0 0
        %1566 = vmatpush1.bf16.xpose.msra.mxu0 0
        %1567 = vmatprep.subr.bf16.mxu0 0
        %1568 = vmatpush1.bf16.xpose.msra.mxu0 0
        %1569 = vmatprep.subr.bf16.mxu0 0
        %1570 = vmatpush1.bf16.xpose.msra.mxu0 0
        %1571 = vmatprep.subr.bf16.mxu0 0
        %1572 = vmatpush1.bf16.xpose.msra.mxu0 0
        %1573 = vmatprep.subr.bf16.mxu0 0
        %1574 = vmatpush1.bf16.xpose.msra.mxu0 0
        %1575 = vmatprep.subr.bf16.mxu0 0
        %1576 = vmatpush1.bf16.xpose.msra.mxu0 0
        %1577 = vmatprep.subr.bf16.mxu0 0
        %1578 = vmatpush1.bf16.xpose.msra.mxu0 0
        %1579 = vmatprep.subr.bf16.mxu0 0
        %1580 = vmatpush1.bf16.xpose.msra.mxu0 0
        %1581 = vmatprep.subr.bf16.mxu0 0
        %1582 = vmatpush1.bf16.xpose.msra.mxu0 0
        %1583 = vmatprep.subr.bf16.mxu0 0
        %1584 = vmatpush1.bf16.xpose.msra.mxu0 0
        %1585 = vmatprep.mubr.bf16.mxu0 0
        %1586 = vmatmul.mubr.bf16.gmra.mrb[0].mxu0 %v1548
        %v1587 = vpop.f32.mrb[0].mxu0
        %v1588 = vadd.f32 0.0, %v1587
        %v1589 = vpop.f32.mrb[0].mxu0
        %v1590 = vpop.f32.mrb[0].mxu0
        %v1591 = vpop.f32.mrb[0].mxu0
        %1592 = vdwg.mxu0
        %v1593 = vsel %vm836, %v1538, -inf
        %1594 = vmax.xlane.f32.xlu0 %v1593
        %v1595 = vpop.xlane.xlu0 %1594
        %v1596 = vsel %vm836, %v1588, -inf
        %1597 = vmax.xlane.f32.xlu0 %v1596
        %v1598 = vpop.xlane.xlu0 %1597
        %v1599 = vsub.f32 %v1538, %v1595
        %v1600 = vsub.f32 %v1588, %v1598
        %v1601 = vmul.f32 %v1599, 1.442695
        %v1602 = vpow.pop %v1601
        %v1603 = vmul.f32 %v1600, 1.442695
        %v1604 = vpow.pop %v1603
        %v1605 = vsel %vm836, %v1602, 0.0
        %1606 = vadd.xlane.f32.xlu0 %v1605
        %v1607 = vpop.xlane.xlu0 %1606
        %v1608 = vsel %vm836, %v1604, 0.0
        %1609 = vadd.xlane.f32.xlu0 %v1608
        %v1610 = vpop.xlane.xlu0 %1609
        %v1611 = vpack.c.bf16 %v1602, %v1602
        %v1612 = vpack.c.bf16 %v1604, %v1604
        %1613 = vrot.lane.b32.xlu0 %v831, 40
        %v1614 = vpop.permute.xlu0 %1613
        %v1616 = vsel %vm836, %v1611, 0
        %v1619 = vsel %vm957, %v1614, 0
        %1621 = vmatprep.subr.bf16.mxu0 0
        %1622 = vmatpush1.bf16.msra.mxu0 %v1619
        %1623 = vmatprep.subr.bf16.mxu0 0
        %1624 = vmatpush1.bf16.msra.mxu0 0
        %1625 = vmatprep.subr.bf16.mxu0 0
        %1626 = vmatpush1.bf16.msra.mxu0 0
        %1627 = vmatprep.subr.bf16.mxu0 0
        %1628 = vmatpush1.bf16.msra.mxu0 0
        %1629 = vmatprep.subr.bf16.mxu0 0
        %1630 = vmatpush1.bf16.msra.mxu0 0
        %1631 = vmatprep.subr.bf16.mxu0 0
        %1632 = vmatpush1.bf16.msra.mxu0 0
        %1633 = vmatprep.subr.bf16.mxu0 0
        %1634 = vmatpush1.bf16.msra.mxu0 0
        %1635 = vmatprep.subr.bf16.mxu0 0
        %1636 = vmatpush1.bf16.msra.mxu0 0
        %1637 = vmatprep.subr.bf16.mxu0 0
        %1638 = vmatpush1.bf16.msra.mxu0 0
        %1639 = vmatprep.subr.bf16.mxu0 0
        %1640 = vmatpush1.bf16.msra.mxu0 0
        %1641 = vmatprep.subr.bf16.mxu0 0
        %1642 = vmatpush1.bf16.msra.mxu0 0
        %1643 = vmatprep.subr.bf16.mxu0 0
        %1644 = vmatpush1.bf16.msra.mxu0 0
        %1645 = vmatprep.subr.bf16.mxu0 0
        %1646 = vmatpush1.bf16.msra.mxu0 0
        %1647 = vmatprep.subr.bf16.mxu0 0
        %1648 = vmatpush1.bf16.msra.mxu0 0
        %1649 = vmatprep.subr.bf16.mxu0 0
        %1650 = vmatpush1.bf16.msra.mxu0 0
        %1651 = vmatprep.subr.bf16.mxu0 0
        %1652 = vmatpush1.bf16.msra.mxu0 0
        %1653 = vmatprep.mubr.bf16.mxu0 0
        %1654 = vmatmul.mubr.bf16.gmra.mrb[0].mxu0 %v1616
        %v1655 = vpop.f32.mrb[0].mxu0
        %v1656 = vadd.f32 0.0, %v1655
        %v1657 = vpop.f32.mrb[0].mxu0
        %v1658 = vpop.f32.mrb[0].mxu0
        %v1659 = vpop.f32.mrb[0].mxu0
        %1660 = vdwg.mxu0
        %1661 = vrot.lane.b32.xlu0 %v832, 40
        %v1662 = vpop.permute.xlu0 %1661
        %v1664 = vsel %vm836, %v1612, 0
        %v1667 = vsel %vm957, %v1662, 0
        %1669 = vmatprep.subr.bf16.mxu0 0
        %1670 = vmatpush1.bf16.msra.mxu0 %v1667
        %1671 = vmatprep.subr.bf16.mxu0 0
        %1672 = vmatpush1.bf16.msra.mxu0 0
        %1673 = vmatprep.subr.bf16.mxu0 0
        %1674 = vmatpush1.bf16.msra.mxu0 0
        %1675 = vmatprep.subr.bf16.mxu0 0
        %1676 = vmatpush1.bf16.msra.mxu0 0
        %1677 = vmatprep.subr.bf16.mxu0 0
        %1678 = vmatpush1.bf16.msra.mxu0 0
        %1679 = vmatprep.subr.bf16.mxu0 0
        %1680 = vmatpush1.bf16.msra.mxu0 0
        %1681 = vmatprep.subr.bf16.mxu0 0
        %1682 = vmatpush1.bf16.msra.mxu0 0
        %1683 = vmatprep.subr.bf16.mxu0 0
        %1684 = vmatpush1.bf16.msra.mxu0 0
        %1685 = vmatprep.subr.bf16.mxu0 0
        %1686 = vmatpush1.bf16.msra.mxu0 0
        %1687 = vmatprep.subr.bf16.mxu0 0
        %1688 = vmatpush1.bf16.msra.mxu0 0
        %1689 = vmatprep.subr.bf16.mxu0 0
        %1690 = vmatpush1.bf16.msra.mxu0 0
        %1691 = vmatprep.subr.bf16.mxu0 0
        %1692 = vmatpush1.bf16.msra.mxu0 0
        %1693 = vmatprep.subr.bf16.mxu0 0
        %1694 = vmatpush1.bf16.msra.mxu0 0
        %1695 = vmatprep.subr.bf16.mxu0 0
        %1696 = vmatpush1.bf16.msra.mxu0 0
        %1697 = vmatprep.subr.bf16.mxu0 0
        %1698 = vmatpush1.bf16.msra.mxu0 0
        %1699 = vmatprep.subr.bf16.mxu0 0
        %1700 = vmatpush1.bf16.msra.mxu0 0
        %1701 = vmatprep.mubr.bf16.mxu0 0
        %1702 = vmatmul.mubr.bf16.gmra.mrb[0].mxu0 %v1664
        %v1703 = vpop.f32.mrb[0].mxu0
        %v1704 = vadd.f32 0.0, %v1703
        %v1705 = vpop.f32.mrb[0].mxu0
        %v1706 = vpop.f32.mrb[0].mxu0
        %v1707 = vpop.f32.mrb[0].mxu0
        %1708 = vdwg.mxu0
        %v1709 = vrcp.pop %v1607
        %v1710 = vrcp.pop %v1610
        %v1711 = vmul.f32 %v1656, %v1709
        %v1712 = vmul.f32 %v1704, %v1710
        %1715 = vrot.lane.b32.xlu0 %v1271, 8
        %v1716 = vpop.permute.xlu0 %1715
        %1717 = vrot.lane.b32.xlu0 %v1272, 8
        %v1718 = vpop.permute.xlu0 %1717
        %1723 = vrot.lane.b32.xlu0 %v1491, 16
        %v1724 = vpop.permute.xlu0 %1723
        %1725 = vrot.lane.b32.xlu0 %v1492, 16
        %v1726 = vpop.permute.xlu0 %1725
        %1731 = vrot.lane.b32.xlu0 %v1711, 24
        %v1732 = vpop.permute.xlu0 %1731
        %1733 = vrot.lane.b32.xlu0 %v1712, 24
        %v1734 = vpop.permute.xlu0 %1733
        %v1737 = vsel %vm836, %v1051, %v1716
        %v1738 = vsel %vm836, %v1052, %v1718
        %vm1739 = vcmask 130048
        %v1740 = vsel %vm1739, %v1737, %v1724
        %v1741 = vsel %vm1739, %v1738, %v1726
        %vm1742 = vcmask 195584
        %v1743 = vsel %vm1742, %v1740, %v1732
        %v1744 = vsel %vm1742, %v1741, %v1734
        %v1745 = vpack.c.bf16 %v1744, %v1743
        %v1746 = vld [vmem:[%s702] sm:$0xf]
        %v1747 = vld [vmem:[%s702 + $0x4] sm:$0xf]
        %v1748 = vld [vmem:[%s702 + $0x8] sm:$0xf]
        %v1749 = vld [vmem:[%s702 + $0xc] sm:$0xf]
        %v1754 = vunpack.c.l.b16 %v1746
        %v1755 = vunpack.c.l.b16 %v1747
        %v1756 = vunpack.c.l.b16 %v1748
        %v1757 = vunpack.c.l.b16 %v1749
        %v1758 = vpack.c.b16 %v1755, %v1754
        %v1759 = vpack.c.b16 %v1757, %v1756
        %v1763 = vsel %vm726, %v1745, 0
        %1765 = vmatprep.subr.bf16.mxu0 0
        %1766 = vmatpush1.bf16.msra.mxu0 %v1758
        %1767 = vmatprep.subr.bf16.mxu0 0
        %1768 = vmatpush1.bf16.msra.mxu0 %v1759
        %1769 = vmatprep.subr.bf16.mxu0 0
        %1770 = vmatpush1.bf16.msra.mxu0 0
        %1771 = vmatprep.subr.bf16.mxu0 0
        %1772 = vmatpush1.bf16.msra.mxu0 0
        %1773 = vmatprep.subr.bf16.mxu0 0
        %1774 = vmatpush1.bf16.msra.mxu0 0
        %1775 = vmatprep.subr.bf16.mxu0 0
        %1776 = vmatpush1.bf16.msra.mxu0 0
        %1777 = vmatprep.subr.bf16.mxu0 0
        %1778 = vmatpush1.bf16.msra.mxu0 0
        %1779 = vmatprep.subr.bf16.mxu0 0
        %1780 = vmatpush1.bf16.msra.mxu0 0
        %1781 = vmatprep.subr.bf16.mxu0 0
        %1782 = vmatpush1.bf16.msra.mxu0 0
        %1783 = vmatprep.subr.bf16.mxu0 0
        %1784 = vmatpush1.bf16.msra.mxu0 0
        %1785 = vmatprep.subr.bf16.mxu0 0
        %1786 = vmatpush1.bf16.msra.mxu0 0
        %1787 = vmatprep.subr.bf16.mxu0 0
        %1788 = vmatpush1.bf16.msra.mxu0 0
        %1789 = vmatprep.subr.bf16.mxu0 0
        %1790 = vmatpush1.bf16.msra.mxu0 0
        %1791 = vmatprep.subr.bf16.mxu0 0
        %1792 = vmatpush1.bf16.msra.mxu0 0
        %1793 = vmatprep.subr.bf16.mxu0 0
        %1794 = vmatpush1.bf16.msra.mxu0 0
        %1795 = vmatprep.subr.bf16.mxu0 0
        %1796 = vmatpush1.bf16.msra.mxu0 0
        %1797 = vmatprep.mubr.bf16.mxu0 0
        %1798 = vmatmul.mubr.bf16.gmra.mrb[0].mxu0 %v1763
        %v1799 = vpop.f32.mrb[0].mxu0
        %v1800 = vadd.f32 0.0, %v1799
        %v1801 = vpop.f32.mrb[0].mxu0
        %v1802 = vpop.f32.mrb[0].mxu0
        %v1803 = vadd.f32 0.0, %v1802
        %v1804 = vpop.f32.mrb[0].mxu0
        %1805 = vdwg.mxu0
        %v1806 = vadd.f32 %v722, %v1800
        %v1807 = vadd.f32 %v723, %v1803
        %v1808 = vld [vmem:[%s574] sm:$0x1]
        %v1809 = vld [vmem:[%s582] sm:$0x1]
        %v1810 = vsel %vm726, %v1806, 0.0
        %1811 = vadd.xlane.f32.xlu0 %v1810
        %v1812 = vpop.xlane.xlu0 %1811
        %v1813 = vsel %vm726, %v1807, 0.0
        %1814 = vadd.xlane.f32.xlu0 %v1813
        %v1815 = vpop.xlane.xlu0 %1814
        %v1816 = vmul.f32 %v1812, %v733
        %v1817 = vmul.f32 %v1815, %v733
        %v1818 = vsub.f32 %v1806, %v1816
        %v1819 = vsub.f32 %v1807, %v1817
        %v1820 = vmul.f32 %v1818, %v1818
        %v1821 = vmul.f32 %v1819, %v1819
        %v1822 = vsel %vm726, %v1820, 0.0
        %1823 = vadd.xlane.f32.xlu0 %v1822
        %v1824 = vpop.xlane.xlu0 %1823
        %v1825 = vsel %vm726, %v1821, 0.0
        %1826 = vadd.xlane.f32.xlu0 %v1825
        %v1827 = vpop.xlane.xlu0 %1826
        %v1828 = vmul.f32 %v1824, %v733
        %v1829 = vmul.f32 %v1827, %v733
        %v1830 = vadd.f32 %v1828, 1e-06
        %v1831 = vadd.f32 %v1829, 1e-06
        %v1832 = vrsqrt.pop %v1830
        %v1833 = vrsqrt.pop %v1831
        %v1834 = vmul.f32 %v1818, %v1832
        %v1835 = vmul.f32 %v1819, %v1833
        %v1837 = vlaneseq
        %v1838 = vshrl.u32 %v1837, 7
        %v1839 = vsub.s32 0, %v1838
        %v1840 = vrot.slane %v1808, %v1839
        %v1842 = vmul.f32 %v1834, %v1840
        %v1843 = vmul.f32 %v1835, %v1840
        %v1845 = vlaneseq
        %v1846 = vshrl.u32 %v1845, 7
        %v1847 = vsub.s32 0, %v1846
        %v1848 = vrot.slane %v1809, %v1847
        %v1850 = vadd.f32 %v1842, %v1848
        %v1851 = vadd.f32 %v1843, %v1848
        %v1852 = vpack.c.bf16 %v1851, %v1850
        %v1853 = vld [vmem:[%s591] sm:$0xf]
        %v1854 = vld [vmem:[%s591 + $0x4] sm:$0xf]
        %v1855 = vld [vmem:[%s591 + $0x8] sm:$0xf]
        %v1856 = vld [vmem:[%s591 + $0xc] sm:$0xf]
        %v1857 = vld [vmem:[%s599] sm:$0x1]
        %v1859 = vlaneseq
        %v1860 = vshrl.u32 %v1859, 7
        %v1861 = vsub.s32 0, %v1860
        %v1862 = vrot.slane %v1857, %v1861
        %v1868 = vunpack.c.l.b16 %v1853
        %v1869 = vunpack.c.l.b16 %v1854
        %v1870 = vunpack.c.l.b16 %v1855
        %v1871 = vunpack.c.l.b16 %v1856
        %v1872 = vpack.c.b16 %v1869, %v1868
        %v1873 = vpack.c.b16 %v1871, %v1870
        %v1877 = vsel %vm726, %v1852, 0
        %1879 = vmatprep.subr.bf16.mxu0 0
        %1880 = vmatpush1.bf16.msra.mxu0 %v1872
        %1881 = vmatprep.subr.bf16.mxu0 0
        %1882 = vmatpush1.bf16.msra.mxu0 %v1873
        %1883 = vmatprep.subr.bf16.mxu0 0
        %1884 = vmatpush1.bf16.msra.mxu0 0
        %1885 = vmatprep.subr.bf16.mxu0 0
        %1886 = vmatpush1.bf16.msra.mxu0 0
        %1887 = vmatprep.subr.bf16.mxu0 0
        %1888 = vmatpush1.bf16.msra.mxu0 0
        %1889 = vmatprep.subr.bf16.mxu0 0
        %1890 = vmatpush1.bf16.msra.mxu0 0
        %1891 = vmatprep.subr.bf16.mxu0 0
        %1892 = vmatpush1.bf16.msra.mxu0 0
        %1893 = vmatprep.subr.bf16.mxu0 0
        %1894 = vmatpush1.bf16.msra.mxu0 0
        %1895 = vmatprep.subr.bf16.mxu0 0
        %1896 = vmatpush1.bf16.msra.mxu0 0
        %1897 = vmatprep.subr.bf16.mxu0 0
        %1898 = vmatpush1.bf16.msra.mxu0 0
        %1899 = vmatprep.subr.bf16.mxu0 0
        %1900 = vmatpush1.bf16.msra.mxu0 0
        %1901 = vmatprep.subr.bf16.mxu0 0
        %1902 = vmatpush1.bf16.msra.mxu0 0
        %1903 = vmatprep.subr.bf16.mxu0 0
        %1904 = vmatpush1.bf16.msra.mxu0 0
        %1905 = vmatprep.subr.bf16.mxu0 0
        %1906 = vmatpush1.bf16.msra.mxu0 0
        %1907 = vmatprep.subr.bf16.mxu0 0
        %1908 = vmatpush1.bf16.msra.mxu0 0
        %1909 = vmatprep.subr.bf16.mxu0 0
        %1910 = vmatpush1.bf16.msra.mxu0 0
        %1911 = vmatprep.mubr.bf16.mxu0 0
        %1912 = vmatmul.mubr.bf16.gmra.mrb[0].mxu0 %v1877
        %v1913 = vpop.f32.mrb[0].mxu0
        %v1914 = vadd.f32 %v1862, %v1913
        %v1915 = vpop.f32.mrb[0].mxu0
        %v1916 = vpop.f32.mrb[0].mxu0
        %v1917 = vadd.f32 %v1862, %v1916
        %v1918 = vpop.f32.mrb[0].mxu0
        %1919 = vdwg.mxu0
        %v1920 = vmax.f32 %v1914, 0.0
        %v1921 = vmax.f32 %v1917, 0.0
        %v1922 = vpack.c.bf16 %v1921, %v1920
        %v1923 = vld [vmem:[%s707] sm:$0xf]
        %v1924 = vld [vmem:[%s707 + $0x4] sm:$0xf]
        %v1925 = vld [vmem:[%s707 + $0x8] sm:$0xf]
        %v1926 = vld [vmem:[%s707 + $0xc] sm:$0xf]
        %v1927 = vld [vmem:[%s707 + $0x10] sm:$0xf]
        %v1928 = vld [vmem:[%s707 + $0x14] sm:$0xf]
        %v1929 = vld [vmem:[%s707 + $0x18] sm:$0xf]
        %v1930 = vld [vmem:[%s707 + $0x1c] sm:$0xf]
        %v1931 = vld [vmem:[%s710] sm:$0x1]
        %v1933 = vlaneseq
        %v1934 = vshrl.u32 %v1933, 7
        %v1935 = vsub.s32 0, %v1934
        %v1936 = vrot.slane %v1931, %v1935
        %v1946 = vunpack.c.l.b16 %v1923
        %v1947 = vunpack.c.l.b16 %v1924
        %v1948 = vunpack.c.l.b16 %v1925
        %v1949 = vunpack.c.l.b16 %v1926
        %v1950 = vunpack.c.l.b16 %v1927
        %v1951 = vunpack.c.l.b16 %v1928
        %v1952 = vunpack.c.l.b16 %v1929
        %v1953 = vunpack.c.l.b16 %v1930
        %v1954 = vpack.c.b16 %v1947, %v1946
        %v1955 = vpack.c.b16 %v1949, %v1948
        %v1956 = vpack.c.b16 %v1951, %v1950
        %v1957 = vpack.c.b16 %v1953, %v1952
        %vm1962 = vcmask 523264
        %v1964 = vsel %vm1962, %v1922, 0
        %1966 = vmatprep.subr.bf16.mxu0 0
        %1967 = vmatpush1.bf16.msra.mxu0 %v1954
        %1968 = vmatprep.subr.bf16.mxu0 0
        %1969 = vmatpush1.bf16.msra.mxu0 %v1955
        %1970 = vmatprep.subr.bf16.mxu0 0
        %1971 = vmatpush1.bf16.msra.mxu0 %v1956
        %1972 = vmatprep.subr.bf16.mxu0 0
        %1973 = vmatpush1.bf16.msra.mxu0 %v1957
        %1974 = vmatprep.subr.bf16.mxu0 0
        %1975 = vmatpush1.bf16.msra.mxu0 0
        %1976 = vmatprep.subr.bf16.mxu0 0
        %1977 = vmatpush1.bf16.msra.mxu0 0
        %1978 = vmatprep.subr.bf16.mxu0 0
        %1979 = vmatpush1.bf16.msra.mxu0 0
        %1980 = vmatprep.subr.bf16.mxu0 0
        %1981 = vmatpush1.bf16.msra.mxu0 0
        %1982 = vmatprep.subr.bf16.mxu0 0
        %1983 = vmatpush1.bf16.msra.mxu0 0
        %1984 = vmatprep.subr.bf16.mxu0 0
        %1985 = vmatpush1.bf16.msra.mxu0 0
        %1986 = vmatprep.subr.bf16.mxu0 0
        %1987 = vmatpush1.bf16.msra.mxu0 0
        %1988 = vmatprep.subr.bf16.mxu0 0
        %1989 = vmatpush1.bf16.msra.mxu0 0
        %1990 = vmatprep.subr.bf16.mxu0 0
        %1991 = vmatpush1.bf16.msra.mxu0 0
        %1992 = vmatprep.subr.bf16.mxu0 0
        %1993 = vmatpush1.bf16.msra.mxu0 0
        %1994 = vmatprep.subr.bf16.mxu0 0
        %1995 = vmatpush1.bf16.msra.mxu0 0
        %1996 = vmatprep.subr.bf16.mxu0 0
        %1997 = vmatpush1.bf16.msra.mxu0 0
        %1998 = vmatprep.mubr.bf16.mxu0 0
        %1999 = vmatmul.mubr.bf16.gmra.mrb[0].mxu0 %v1964
        %v2000 = vpop.f32.mrb[0].mxu0
        %v2001 = vadd.f32 %v1936, %v2000
        %v2002 = vpop.f32.mrb[0].mxu0
        %v2003 = vpop.f32.mrb[0].mxu0
        %v2004 = vadd.f32 %v1936, %v2003
        %v2005 = vpop.f32.mrb[0].mxu0
        %2006 = vdwg.mxu0
        %v2007 = vadd.f32 %v1806, %v2001
        %v2008 = vadd.f32 %v1807, %v2004
        %p2009 = scmp.eq.s32.totalorder %s41, 1
        // Predicated region
        $region97: #{tpu_custom_call.1} parent=71 // pred_check
          %p2010 = pneg %p2009
        $region98: #{tpu_custom_call.1} parent=71 // pred_check_branch
          %2012 = sbr.rel (%p2010) target = $region100
        $region99: #{tpu_custom_call.1} parent=71 // pred_region
          %v2013 = vld [vmem:[%s11] sm:$0x1]
          %v2014 = vld [vmem:[%s12] sm:$0x1]
          %v2015 = vsel %vm726, %v2007, 0.0
          %2016 = vadd.xlane.f32.xlu0 %v2015
          %v2017 = vpop.xlane.xlu0 %2016
          %v2018 = vsel %vm726, %v2008, 0.0
          %2019 = vadd.xlane.f32.xlu0 %v2018
          %v2020 = vpop.xlane.xlu0 %2019
          %v2021 = vmul.f32 %v2017, %v733
          %v2022 = vmul.f32 %v2020, %v733
          %v2023 = vsub.f32 %v2007, %v2021
          %v2024 = vsub.f32 %v2008, %v2022
          %v2025 = vmul.f32 %v2023, %v2023
          %v2026 = vmul.f32 %v2024, %v2024
          %v2027 = vsel %vm726, %v2025, 0.0
          %2028 = vadd.xlane.f32.xlu0 %v2027
          %v2029 = vpop.xlane.xlu0 %2028
          %v2030 = vsel %vm726, %v2026, 0.0
          %2031 = vadd.xlane.f32.xlu0 %v2030
          %v2032 = vpop.xlane.xlu0 %2031
          %v2033 = vmul.f32 %v2029, %v733
          %v2034 = vmul.f32 %v2032, %v733
          %v2035 = vadd.f32 %v2033, 1e-06
          %v2036 = vadd.f32 %v2034, 1e-06
          %v2037 = vrsqrt.pop %v2035
          %v2038 = vrsqrt.pop %v2036
          %v2039 = vmul.f32 %v2023, %v2037
          %v2040 = vmul.f32 %v2024, %v2038
          %v2042 = vlaneseq
          %v2043 = vshrl.u32 %v2042, 7
          %v2044 = vsub.s32 0, %v2043
          %v2045 = vrot.slane %v2013, %v2044
          %v2047 = vmul.f32 %v2039, %v2045
          %v2048 = vmul.f32 %v2040, %v2045
          %v2050 = vlaneseq
          %v2051 = vshrl.u32 %v2050, 7
          %v2052 = vsub.s32 0, %v2051
          %v2053 = vrot.slane %v2014, %v2052
          %v2055 = vadd.f32 %v2047, %v2053
          %v2056 = vadd.f32 %v2048, %v2053
          %2057 = vst.msk [vmem:[%s683] sm:$0xff] %vm726, %v2055
          %2058 = vst.msk [vmem:[%s683 + $0x8] sm:$0xff] %vm726, %v2056
        $region100: #{tpu_custom_call.1} parent=71 // pred_fallthru
          _
        %p2059 = scmp.lt.s32.totalorder %s41, 1
        // Predicated region
        $region101: #{tpu_custom_call.1} parent=71 // pred_check
          %p2060 = pneg %p2059
        $region102: #{tpu_custom_call.1} parent=71 // pred_check_branch
          %2062 = sbr.rel (%p2060) target = $region104
        $region103: #{tpu_custom_call.1} parent=71 // pred_region
          %2063 = vst.msk [vmem:[%s683] sm:$0xff] %vm726, %v2007
          %2064 = vst.msk [vmem:[%s683 + $0x8] sm:$0xff] %vm726, %v2008
        $region104: #{tpu_custom_call.1} parent=71 // pred_fallthru
          _
        %s2065 = sand.u32 %s384, 1
        %s2066 = scalar_lea.sflag [#allocation4], %s2065
        %s2067 = sand.u32 %s384, 1
        %s2068 = smul.addr %s2067, 16
        %s2069 = scalar_lea.vmem [#allocation11], %s2068
        // Predicated region
        $region105: #{tpu_custom_call.1} parent=71 // pred_check
          %p2070 = pneg %p394
        $region106: #{tpu_custom_call.1} parent=71 // pred_check_branch
          %2072 = sbr.rel (%p2070) target = $region108
        $region107: #{tpu_custom_call.1} parent=71 // pred_region
          %s2073 = smul.u32 2, %s40
          %s2075 = ssub.s32 256, 256
          %2076 = vsyncadd %s2066, %s2075
          %s2077 = smul.addr %s2073, 128
          %s2078 = scalar_lea.hbm %s13, %s2077
          %s2079 = sshll.u32 %s2069, 4
          %s2080 = int_to_ptr.vmem [resolvable:$true] %s2079
          %2085 = dma.vmem_to_hbm [thread:$0]  %s2080, 256, %s2078, %s2066, 128, 128, 8
        $region108: #{tpu_custom_call.1} parent=71 // pred_fallthru
          _
      $region72: #{tpu_custom_call.1} parent=5 // pred_fallthru
        _
      %p2086 = scmp.le.s32.totalorder 2, %s31
      // Predicated region
      $region109: #{tpu_custom_call.1} parent=5 // pred_check
        %p2087 = pneg %p2086
      $region110: #{tpu_custom_call.1} parent=5 // pred_check_branch
        %2089 = sbr.rel (%p2087) target = $region112
      $region111: #{tpu_custom_call.1} parent=5 // pred_region
        %s2090 = ssub.s32 %s31, 2
        // Predicated region
        $region113: #{tpu_custom_call.1} parent=111 // pred_check
          %p2091 = pneg %p400
        $region114: #{tpu_custom_call.1} parent=111 // pred_check_branch
          %2093 = sbr.rel (%p2091) target = $region116
        $region115: #{tpu_custom_call.1} parent=111 // pred_region
          %s2094 = sand.u32 %s385, 1
          %s2095 = scalar_lea.sflag [#allocation4], %s2094
          %s2096 = sand.u32 %s385, 1
          %s2097 = smul.addr %s2096, 16
          %s2098 = scalar_lea.vmem [#allocation11], %s2097
          %2099 = dma.done %s2095, 256
        $region116: #{tpu_custom_call.1} parent=111 // pred_fallthru
          _
      $region112: #{tpu_custom_call.1} parent=5 // pred_fallthru
        _
    $region6: #{tpu_custom_call.1} parent=1 // loop_footer
      %s35 = sadd.s32 1, %s31
    $region7: #{tpu_custom_call.1} parent=1 // loop_footer_branch
      %30 = sbr.rel target = $region3
    $region8: #{tpu_custom_call.1} parent=1 // loop_exit
      _
    %2100 = vsyncpa [#allocation3], 1
    %s2101 = scalar_lea.sflag [#allocation3], 1
    %2102 = vsyncpa %s2101, 1
    %2103 = vsyncpa [#allocation6], 1
    %s2104 = scalar_lea.sflag [#allocation6], 1
    %2105 = vsyncpa %s2104, 1
    %2106 = vsyncpa [#allocation9], 1
    %s2107 = scalar_lea.sflag [#allocation9], 1
    %2108 = vsyncpa %s2107, 1
    %2109 = vsyncpa [#allocation4], 1
    %s2110 = scalar_lea.sflag [#allocation4], 1
    %2111 = vsyncpa %s2110, 1

</llo_original>
